<compile_context>
chip_gen: v7x
topology: tpu7x:2x2x1
jax: 0.10.0
libtpu: 0.0.40
codegen_flags: <defaults>
</compile_context>

<pallas_src>
import functools

import jax
import jax.numpy as jnp
from jax.experimental import pallas as pl
from jax.experimental.pallas import tpu as pltpu


def _round_up(x, m):
    return (x + m - 1) // m * m


def _conv2d_kernel(xa_ref, xb_ref, w_ref, b_ref, o_ref, *,
                   kh, kw, stride, th, w_out_p):
    """One grid step == one (batch element, output-row tile).

    xa_ref: (1, th*stride, W_p, Cin)   input rows of this row tile
    xb_ref: (1, th*stride, W_p, Cin)   next row block (halo source)
    w_ref:  (KH, KW, Cin, Cout_p)
    b_ref:  (1, Cout_p)
    o_ref:  (1, th, W_out_p, Cout_p)
    """
    cin = xa_ref.shape[-1]
    cout_p = o_ref.shape[-1]
    halo = kh - stride                                   # extra rows needed

    xa = xa_ref[0]                                       # (th*stride, W_p, Cin)
    if halo > 0:
        x = jnp.concatenate([xa, xb_ref[0][:halo]], axis=0)
    else:
        x = xa                                           # (rows, W_p, Cin)

    m = th * w_out_p
    acc = None
    for dh in range(kh):                                 # kh*kw taps (small)
        for dw in range(kw):
            if stride == 1:
                patch = x[dh:dh + th, dw:dw + w_out_p, :]
            else:
                patch = x[dh:dh + (th - 1) * stride + 1:stride,
                          dw:dw + (w_out_p - 1) * stride + 1:stride, :]
            # (th*W_out_p, Cin) x (Cin, Cout_p) on the MXU, f32 accumulation.
            part = jnp.dot(patch.reshape(m, cin), w_ref[dh, dw],
                           preferred_element_type=jnp.float32)
            acc = part if acc is None else acc + part
    acc = acc + b_ref[...].astype(jnp.float32)           # bias added once/tile
    o_ref[...] = acc.reshape(1, th, w_out_p, cout_p).astype(o_ref.dtype)


def conv2d_pallas(x_nchw, weight_oihw, bias, *, stride=1, padding=0,
                  row_tile=None):
    """Conv2d forward (groups=1, dilation=1) via a Pallas TPU kernel.

    Accepts / returns PyTorch-style NCHW; computes in NHWC / HWIO internally.
    """
    n, cin, _, _ = x_nchw.shape
    cout, _, kh, kw = weight_oihw.shape

    # TODO(synk): for very small Cin, a W-in-lanes (NCHW-blocked) layout would
    # make the input loads lane-dense and drop the NCHW<->NHWC transposes; the
    # generic-channel NHWC path is kept here.
    x = jnp.transpose(x_nchw, (0, 2, 3, 1))              # NCHW -> NHWC
    if padding:
        x = jnp.pad(x, ((0, 0), (padding, padding), (padding, padding), (0, 0)))
    hp, wp = x.shape[1], x.shape[2]
    h_out = (hp - kh) // stride + 1
    w_out = (wp - kw) // stride + 1

    # ---- tile sizes -------------------------------------------------------
    w_out_p = _round_up(w_out, 8)                        # sublane-aligned W
    cout_p = _round_up(cout, 128)                        # lane-dense Cout
    min_th = max(1, -(-(kh - stride) // stride)) if kh > stride else 1
    if row_tile is None:
        # big enough that M = th*W_out_p feeds the MXU, small enough that the
        # double-buffered blocks stay far below v7x's 64 MiB VMEM.
        row_tile = max(1, -(-256 // w_out_p))
    th = max(min(row_tile, h_out), min_th)
    t_tiles = -(-h_out // th)
    h_out_p = t_tiles * th

    # ---- pad input so every block (incl. the +1 halo block) is in-bounds.
    hp_p = (t_tiles + 1) * th * stride
    wp_p = max(wp, (w_out_p - 1) * stride + kw)
    x = jnp.pad(x, ((0, 0), (0, hp_p - hp), (0, wp_p - wp), (0, 0)))

    # ---- pad weights / bias on Cout so output stores are lane-dense.
    w = jnp.transpose(weight_oihw, (2, 3, 1, 0))         # OIHW -> HWIO
    w = jnp.pad(w, ((0, 0), (0, 0), (0, 0), (0, cout_p - cout)))
    b = jnp.pad(bias, (0, cout_p - cout)).reshape(1, cout_p)

    kernel = functools.partial(_conv2d_kernel, kh=kh, kw=kw, stride=stride,
                               th=th, w_out_p=w_out_p)

    itemsize = x.dtype.itemsize
    xblk = th * stride * wp_p * cin * itemsize
    wblk = kh * kw * cin * cout_p * itemsize
    oblk = th * w_out_p * cout_p * itemsize
    blk_bytes = 2 * (2 * xblk + wblk + oblk)             # double-buffered
    vmem_limit = int(min(60 * 1024 * 1024,
                         max(24 * 1024 * 1024, 4 * blk_bytes)))

    cost = pl.CostEstimate(
        flops=2 * n * h_out * w_out * kh * kw * cin * cout,
        transcendentals=0,
        bytes_accessed=int((x.size + w.size + n * h_out_p * w_out_p * cout_p)
                           * itemsize))

    out_nhwc = pl.pallas_call(
        kernel,
        out_shape=jax.ShapeDtypeStruct((n, h_out_p, w_out_p, cout_p), x.dtype),
        grid_spec=pltpu.PrefetchScalarGridSpec(
            num_scalar_prefetch=0,
            grid=(n, t_tiles),
            in_specs=[
                pl.BlockSpec((1, th * stride, wp_p, cin),
                             lambda i, t: (i, t, 0, 0)),
                pl.BlockSpec((1, th * stride, wp_p, cin),   # halo rows
                             lambda i, t: (i, t + 1, 0, 0)),
                pl.BlockSpec((kh, kw, cin, cout_p), lambda i, t: (0, 0, 0, 0)),
                pl.BlockSpec((1, cout_p), lambda i, t: (0, 0)),
            ],
            out_specs=pl.BlockSpec((1, th, w_out_p, cout_p),
                                   lambda i, t: (i, t, 0, 0)),
        ),
        compiler_params=pltpu.CompilerParams(
            dimension_semantics=("parallel", "parallel"),
            vmem_limit_bytes=vmem_limit),
        cost_estimate=cost,
    )(x, x, w, b)

    out = out_nhwc[:, :h_out, :w_out, :cout]
    # TODO(synk): emitting NCHW (W_out in lanes) directly from the kernel would
    # delete this boundary transpose; kept NHWC output for generality.
    return jnp.transpose(out, (0, 3, 1, 2)), (h_out, w_out)


class InputSizeAwareConv2d:
    """JAX/Pallas mirror of the PyTorch module's forward semantics."""

    def __init__(self, in_channels, out_channels, kernel_size,
                 stride=1, padding=0, bias=True, key=None):
        key = jax.random.PRNGKey(0) if key is None else key
        kw_, kb_ = jax.random.split(key)
        fan_in = in_channels * kernel_size * kernel_size
        scale = 1.0 / jnp.sqrt(jnp.float32(fan_in))
        # deterministic synthetic parameters (PyTorch OIHW weight layout)
        self.weight = scale * jax.random.normal(
            kw_, (out_channels, in_channels, kernel_size, kernel_size),
            dtype=jnp.float32)
        self.bias = (scale * jax.random.normal(kb_, (out_channels,),
                                               dtype=jnp.float32)
                     if bias else jnp.zeros((out_channels,), jnp.float32))
        self.stride = stride
        self.padding = padding
        self.H_out = None
        self.W_out = None
        # TODO(synk): the gradient hook (grad / (H_out*W_out)) is backward-only
        # and has no forward-pass Pallas equivalent.

    def __call__(self, x_nchw):
        out, (h_out, w_out) = conv2d_pallas(
            x_nchw, self.weight, self.bias,
            stride=self.stride, padding=self.padding)
        self.H_out, self.W_out = h_out, w_out
        return out


def _reference_conv(x_nchw, weight_oihw, bias, stride, padding):
    x_nhwc = jnp.transpose(x_nchw, (0, 2, 3, 1))
    w_hwio = jnp.transpose(weight_oihw, (2, 3, 1, 0))
    ref = jax.lax.conv_general_dilated(
        x_nhwc, w_hwio, window_strides=(stride, stride),
        padding=((padding, padding), (padding, padding)),
        dimension_numbers=("NHWC", "HWIO", "NHWC")) + bias
    return jnp.transpose(ref, (0, 3, 1, 2))


if __name__ == "__main__":
    key = jax.random.PRNGKey(0)
    kx, kp = jax.random.split(key)

    # small shapes consistent with the module: NCHW input
    N, C_IN, H, W = 2, 4, 16, 16
    C_OUT, K = 8, 3

    x = jax.random.normal(kx, (N, C_IN, H, W), dtype=jnp.float32)

    # --- case 1: no padding -------------------------------------------------
    module = InputSizeAwareConv2d(C_IN, C_OUT, K, stride=1, padding=0, key=kp)
    out = jax.block_until_ready(module(x))
    ref = _reference_conv(x, module.weight, module.bias, 1, 0)
    assert out.shape == (N, C_OUT, H - K + 1, W - K + 1), out.shape
    assert (module.H_out, module.W_out) == (H - K + 1, W - K + 1)
    assert jnp.allclose(out, ref, rtol=1e-4, atol=1e-4), \
        float(jnp.max(jnp.abs(out - ref)))

    # --- case 2: same-padding -------------------------------------------------
    module2 = InputSizeAwareConv2d(C_IN, C_OUT, K, stride=1, padding=1, key=kp)
    out2 = jax.block_until_ready(module2(x))
    ref2 = _reference_conv(x, module2.weight, module2.bias, 1, 1)
    assert out2.shape == (N, C_OUT, H, W), out2.shape
    assert (module2.H_out, module2.W_out) == (H, W)
    assert jnp.allclose(out2, ref2, rtol=1e-4, atol=1e-4), \
        float(jnp.max(jnp.abs(out2 - ref2)))

    print("KERNEL_OK")
</pallas_src>

<mosaic_0001>
module attributes {stable_mosaic.version = 11 : i64} {
  func.func @_conv2d_kernel(%arg0: i32, %arg1: i32, %arg2: memref<1x14x18x4xf32, #tpu.memory_space<vmem>>, %arg3: memref<1x14x18x4xf32, #tpu.memory_space<vmem>>, %arg4: memref<3x3x4x128xf32, #tpu.memory_space<vmem>>, %arg5: memref<1x128xf32, #tpu.memory_space<vmem>>, %arg6: memref<1x14x16x128xf32, #tpu.memory_space<vmem>>) attributes {dimension_semantics = [#tpu.dimension_semantics<parallel>, #tpu.dimension_semantics<parallel>], iteration_bounds = array<i64: 2, 1>, scalar_prefetch = 0 : i64, scratch_operands = 0 : i64, tpu.core_type = #tpu.core_type<tc>, window_params = [{transform_indices = @transform_0, window_bounds = array<i64: 1, 14, 18, 4>}, {transform_indices = @transform_1, window_bounds = array<i64: 1, 14, 18, 4>}, {pipeline_mode = #tpu.pipeline_mode<synchronous>, transform_indices = @transform_2, window_bounds = array<i64: 3, 3, 4, 128>}, {pipeline_mode = #tpu.pipeline_mode<synchronous>, transform_indices = @transform_3, window_bounds = array<i64: 1, 128>}, {transform_indices = @transform_4, window_bounds = array<i64: 1, 14, 16, 128>}]} {
    %c0 = arith.constant 0 : index
    %c0_0 = arith.constant 0 : index
    %c0_1 = arith.constant 0 : index
    %c0_2 = arith.constant 0 : index
    %0 = vector.load %arg2[%c0, %c0_0, %c0_1, %c0_2] : memref<1x14x18x4xf32, #tpu.memory_space<vmem>>, vector<1x14x18x4xf32>
    %1 = vector.shape_cast %0 : vector<1x14x18x4xf32> to vector<14x18x4xf32>
    %c0_3 = arith.constant 0 : index
    %c0_4 = arith.constant 0 : index
    %c0_5 = arith.constant 0 : index
    %c0_6 = arith.constant 0 : index
    %2 = vector.load %arg3[%c0_3, %c0_4, %c0_5, %c0_6] : memref<1x14x18x4xf32, #tpu.memory_space<vmem>>, vector<1x14x18x4xf32>
    %3 = vector.shape_cast %2 : vector<1x14x18x4xf32> to vector<14x18x4xf32>
    %4 = vector.extract_strided_slice %3 {offsets = [0, 0, 0], sizes = [2, 18, 4], strides = [1, 1, 1]} : vector<14x18x4xf32> to vector<2x18x4xf32>
    %5 = tpu.concatenate %1, %4 in 0 : vector<14x18x4xf32>, vector<2x18x4xf32> -> vector<16x18x4xf32>
    %6 = vector.extract_strided_slice %5 {offsets = [0, 0, 0], sizes = [14, 16, 4], strides = [1, 1, 1]} : vector<16x18x4xf32> to vector<14x16x4xf32>
    %7 = vector.shape_cast %6 : vector<14x16x4xf32> to vector<224x4xf32>
    %c0_7 = arith.constant 0 : index
    %c0_8 = arith.constant 0 : index
    %c0_9 = arith.constant 0 : index
    %c0_10 = arith.constant 0 : index
    %8 = vector.load %arg4[%c0_7, %c0_8, %c0_9, %c0_10] : memref<3x3x4x128xf32, #tpu.memory_space<vmem>>, vector<1x1x4x128xf32>
    %9 = vector.shape_cast %8 : vector<1x1x4x128xf32> to vector<4x128xf32>
    %cst = arith.constant dense<0.000000e+00> : vector<224x128xf32>
    %10 = tpu.matmul %7, %9, %cst {dimension_numbers = #tpu.dot_dimension_numbers<[1], [0], [0], [1], [0, 0, 1, 1], [], []>} : vector<224x4xf32>, vector<4x128xf32>, vector<224x128xf32> -> vector<224x128xf32>
    %11 = vector.extract_strided_slice %5 {offsets = [0, 1, 0], sizes = [14, 16, 4], strides = [1, 1, 1]} : vector<16x18x4xf32> to vector<14x16x4xf32>
    %12 = vector.shape_cast %11 : vector<14x16x4xf32> to vector<224x4xf32>
    %c0_11 = arith.constant 0 : index
    %c1 = arith.constant 1 : index
    %c0_12 = arith.constant 0 : index
    %c0_13 = arith.constant 0 : index
    %13 = vector.load %arg4[%c0_11, %c1, %c0_12, %c0_13] : memref<3x3x4x128xf32, #tpu.memory_space<vmem>>, vector<1x1x4x128xf32>
    %14 = vector.shape_cast %13 : vector<1x1x4x128xf32> to vector<4x128xf32>
    %cst_14 = arith.constant dense<0.000000e+00> : vector<224x128xf32>
    %15 = tpu.matmul %12, %14, %cst_14 {dimension_numbers = #tpu.dot_dimension_numbers<[1], [0], [0], [1], [0, 0, 1, 1], [], []>} : vector<224x4xf32>, vector<4x128xf32>, vector<224x128xf32> -> vector<224x128xf32>
    %16 = arith.addf %10, %15 : vector<224x128xf32>
    %17 = vector.extract_strided_slice %5 {offsets = [0, 2, 0], sizes = [14, 16, 4], strides = [1, 1, 1]} : vector<16x18x4xf32> to vector<14x16x4xf32>
    %18 = vector.shape_cast %17 : vector<14x16x4xf32> to vector<224x4xf32>
    %c0_15 = arith.constant 0 : index
    %c2 = arith.constant 2 : index
    %c0_16 = arith.constant 0 : index
    %c0_17 = arith.constant 0 : index
    %19 = vector.load %arg4[%c0_15, %c2, %c0_16, %c0_17] : memref<3x3x4x128xf32, #tpu.memory_space<vmem>>, vector<1x1x4x128xf32>
    %20 = vector.shape_cast %19 : vector<1x1x4x128xf32> to vector<4x128xf32>
    %cst_18 = arith.constant dense<0.000000e+00> : vector<224x128xf32>
    %21 = tpu.matmul %18, %20, %cst_18 {dimension_numbers = #tpu.dot_dimension_numbers<[1], [0], [0], [1], [0, 0, 1, 1], [], []>} : vector<224x4xf32>, vector<4x128xf32>, vector<224x128xf32> -> vector<224x128xf32>
    %22 = arith.addf %16, %21 : vector<224x128xf32>
    %23 = vector.extract_strided_slice %5 {offsets = [1, 0, 0], sizes = [14, 16, 4], strides = [1, 1, 1]} : vector<16x18x4xf32> to vector<14x16x4xf32>
    %24 = vector.shape_cast %23 : vector<14x16x4xf32> to vector<224x4xf32>
    %c1_19 = arith.constant 1 : index
    %c0_20 = arith.constant 0 : index
    %c0_21 = arith.constant 0 : index
    %c0_22 = arith.constant 0 : index
    %25 = vector.load %arg4[%c1_19, %c0_20, %c0_21, %c0_22] : memref<3x3x4x128xf32, #tpu.memory_space<vmem>>, vector<1x1x4x128xf32>
    %26 = vector.shape_cast %25 : vector<1x1x4x128xf32> to vector<4x128xf32>
    %cst_23 = arith.constant dense<0.000000e+00> : vector<224x128xf32>
    %27 = tpu.matmul %24, %26, %cst_23 {dimension_numbers = #tpu.dot_dimension_numbers<[1], [0], [0], [1], [0, 0, 1, 1], [], []>} : vector<224x4xf32>, vector<4x128xf32>, vector<224x128xf32> -> vector<224x128xf32>
    %28 = arith.addf %22, %27 : vector<224x128xf32>
    %29 = vector.extract_strided_slice %5 {offsets = [1, 1, 0], sizes = [14, 16, 4], strides = [1, 1, 1]} : vector<16x18x4xf32> to vector<14x16x4xf32>
    %30 = vector.shape_cast %29 : vector<14x16x4xf32> to vector<224x4xf32>
    %c1_24 = arith.constant 1 : index
    %c1_25 = arith.constant 1 : index
    %c0_26 = arith.constant 0 : index
    %c0_27 = arith.constant 0 : index
    %31 = vector.load %arg4[%c1_24, %c1_25, %c0_26, %c0_27] : memref<3x3x4x128xf32, #tpu.memory_space<vmem>>, vector<1x1x4x128xf32>
    %32 = vector.shape_cast %31 : vector<1x1x4x128xf32> to vector<4x128xf32>
    %cst_28 = arith.constant dense<0.000000e+00> : vector<224x128xf32>
    %33 = tpu.matmul %30, %32, %cst_28 {dimension_numbers = #tpu.dot_dimension_numbers<[1], [0], [0], [1], [0, 0, 1, 1], [], []>} : vector<224x4xf32>, vector<4x128xf32>, vector<224x128xf32> -> vector<224x128xf32>
    %34 = arith.addf %28, %33 : vector<224x128xf32>
    %35 = vector.extract_strided_slice %5 {offsets = [1, 2, 0], sizes = [14, 16, 4], strides = [1, 1, 1]} : vector<16x18x4xf32> to vector<14x16x4xf32>
    %36 = vector.shape_cast %35 : vector<14x16x4xf32> to vector<224x4xf32>
    %c1_29 = arith.constant 1 : index
    %c2_30 = arith.constant 2 : index
    %c0_31 = arith.constant 0 : index
    %c0_32 = arith.constant 0 : index
    %37 = vector.load %arg4[%c1_29, %c2_30, %c0_31, %c0_32] : memref<3x3x4x128xf32, #tpu.memory_space<vmem>>, vector<1x1x4x128xf32>
    %38 = vector.shape_cast %37 : vector<1x1x4x128xf32> to vector<4x128xf32>
    %cst_33 = arith.constant dense<0.000000e+00> : vector<224x128xf32>
    %39 = tpu.matmul %36, %38, %cst_33 {dimension_numbers = #tpu.dot_dimension_numbers<[1], [0], [0], [1], [0, 0, 1, 1], [], []>} : vector<224x4xf32>, vector<4x128xf32>, vector<224x128xf32> -> vector<224x128xf32>
    %40 = arith.addf %34, %39 : vector<224x128xf32>
    %41 = vector.extract_strided_slice %5 {offsets = [2, 0, 0], sizes = [14, 16, 4], strides = [1, 1, 1]} : vector<16x18x4xf32> to vector<14x16x4xf32>
    %42 = vector.shape_cast %41 : vector<14x16x4xf32> to vector<224x4xf32>
    %c2_34 = arith.constant 2 : index
    %c0_35 = arith.constant 0 : index
    %c0_36 = arith.constant 0 : index
    %c0_37 = arith.constant 0 : index
    %43 = vector.load %arg4[%c2_34, %c0_35, %c0_36, %c0_37] : memref<3x3x4x128xf32, #tpu.memory_space<vmem>>, vector<1x1x4x128xf32>
    %44 = vector.shape_cast %43 : vector<1x1x4x128xf32> to vector<4x128xf32>
    %cst_38 = arith.constant dense<0.000000e+00> : vector<224x128xf32>
    %45 = tpu.matmul %42, %44, %cst_38 {dimension_numbers = #tpu.dot_dimension_numbers<[1], [0], [0], [1], [0, 0, 1, 1], [], []>} : vector<224x4xf32>, vector<4x128xf32>, vector<224x128xf32> -> vector<224x128xf32>
    %46 = arith.addf %40, %45 : vector<224x128xf32>
    %47 = vector.extract_strided_slice %5 {offsets = [2, 1, 0], sizes = [14, 16, 4], strides = [1, 1, 1]} : vector<16x18x4xf32> to vector<14x16x4xf32>
    %48 = vector.shape_cast %47 : vector<14x16x4xf32> to vector<224x4xf32>
    %c2_39 = arith.constant 2 : index
    %c1_40 = arith.constant 1 : index
    %c0_41 = arith.constant 0 : index
    %c0_42 = arith.constant 0 : index
    %49 = vector.load %arg4[%c2_39, %c1_40, %c0_41, %c0_42] : memref<3x3x4x128xf32, #tpu.memory_space<vmem>>, vector<1x1x4x128xf32>
    %50 = vector.shape_cast %49 : vector<1x1x4x128xf32> to vector<4x128xf32>
    %cst_43 = arith.constant dense<0.000000e+00> : vector<224x128xf32>
    %51 = tpu.matmul %48, %50, %cst_43 {dimension_numbers = #tpu.dot_dimension_numbers<[1], [0], [0], [1], [0, 0, 1, 1], [], []>} : vector<224x4xf32>, vector<4x128xf32>, vector<224x128xf32> -> vector<224x128xf32>
    %52 = arith.addf %46, %51 : vector<224x128xf32>
    %53 = vector.extract_strided_slice %5 {offsets = [2, 2, 0], sizes = [14, 16, 4], strides = [1, 1, 1]} : vector<16x18x4xf32> to vector<14x16x4xf32>
    %54 = vector.shape_cast %53 : vector<14x16x4xf32> to vector<224x4xf32>
    %c2_44 = arith.constant 2 : index
    %c2_45 = arith.constant 2 : index
    %c0_46 = arith.constant 0 : index
    %c0_47 = arith.constant 0 : index
    %55 = vector.load %arg4[%c2_44, %c2_45, %c0_46, %c0_47] : memref<3x3x4x128xf32, #tpu.memory_space<vmem>>, vector<1x1x4x128xf32>
    %56 = vector.shape_cast %55 : vector<1x1x4x128xf32> to vector<4x128xf32>
    %cst_48 = arith.constant dense<0.000000e+00> : vector<224x128xf32>
    %57 = tpu.matmul %54, %56, %cst_48 {dimension_numbers = #tpu.dot_dimension_numbers<[1], [0], [0], [1], [0, 0, 1, 1], [], []>} : vector<224x4xf32>, vector<4x128xf32>, vector<224x128xf32> -> vector<224x128xf32>
    %58 = arith.addf %52, %57 : vector<224x128xf32>
    %c0_49 = arith.constant 0 : index
    %c0_50 = arith.constant 0 : index
    %59 = vector.load %arg5[%c0_49, %c0_50] : memref<1x128xf32, #tpu.memory_space<vmem>>, vector<1x128xf32>
    %60 = vector.broadcast %59 : vector<1x128xf32> to vector<224x128xf32>
    %61 = arith.addf %58, %60 : vector<224x128xf32>
    %62 = vector.shape_cast %61 : vector<224x128xf32> to vector<1x14x16x128xf32>
    %c0_51 = arith.constant 0 : index
    %c0_52 = arith.constant 0 : index
    %c0_53 = arith.constant 0 : index
    %c0_54 = arith.constant 0 : index
    %63 = vector.load %arg6[%c0_51, %c0_52, %c0_53, %c0_54] : memref<1x14x16x128xf32, #tpu.memory_space<vmem>>, vector<1x14x16x128xf32>
    tpu.vector_store %arg6[%c0_51, %c0_52, %c0_53, %c0_54], %62 {strides = array<i32>} : memref<1x14x16x128xf32, #tpu.memory_space<vmem>>, vector<1x14x16x128xf32>,
    return
  }
  func.func @transform_0(%arg0: i32, %arg1: i32) -> (i32, i32, i32, i32) {
    %c0_i32 = arith.constant 0 : i32
    %c0_i32_0 = arith.constant 0 : i32
    %c0_i32_1 = arith.constant 0 : i32
    return %arg0, %arg1, %c0_i32, %c0_i32_0 : i32, i32, i32, i32
  }
  func.func @transform_1(%arg0: i32, %arg1: i32) -> (i32, i32, i32, i32) {
    %c1_i32 = arith.constant 1 : i32
    %0 = arith.addi %arg1, %c1_i32 : i32
    %c0_i32 = arith.constant 0 : i32
    %c0_i32_0 = arith.constant 0 : i32
    %c0_i32_1 = arith.constant 0 : i32
    return %arg0, %0, %c0_i32, %c0_i32_0 : i32, i32, i32, i32
  }
  func.func @transform_2(%arg0: i32, %arg1: i32) -> (i32, i32, i32, i32) {
    %c0_i32 = arith.constant 0 : i32
    %c0_i32_0 = arith.constant 0 : i32
    %c0_i32_1 = arith.constant 0 : i32
    %c0_i32_2 = arith.constant 0 : i32
    %c0_i32_3 = arith.constant 0 : i32
    return %c0_i32, %c0_i32_0, %c0_i32_1, %c0_i32_2 : i32, i32, i32, i32
  }
  func.func @transform_3(%arg0: i32, %arg1: i32) -> (i32, i32) {
    %c0_i32 = arith.constant 0 : i32
    %c0_i32_0 = arith.constant 0 : i32
    %c0_i32_1 = arith.constant 0 : i32
    return %c0_i32, %c0_i32_0 : i32, i32
  }
  func.func @transform_4(%arg0: i32, %arg1: i32) -> (i32, i32, i32, i32) {
    %c0_i32 = arith.constant 0 : i32
    %c0_i32_0 = arith.constant 0 : i32
    %c0_i32_1 = arith.constant 0 : i32
    return %arg0, %arg1, %c0_i32, %c0_i32_0 : i32, i32, i32, i32
  }
}

</mosaic_0001>

<llo_original>
// kernel: tpu_custom_call.1
$region0: #{tpu_custom_call.1}
  #allocation0 [shape = 'u32[]', space=smem, size = 0x4, offset = 0x4, fixed_abs, tag = 'smem constant byte address 0x4 - core index']
  #allocation1 [shape = 'u32[144,128]{1,0:T(1,128)}', space=vmem, size = 0x12000, scoped, tag = 'internal scratch']
  %s0 = inlined_call_operand.vmem [shape: f32[2,28,18,4], index: 0, kind: input, shape index: {}]
  %s1 = inlined_call_operand.vmem [shape: f32[2,28,18,4], index: 1, kind: input, shape index: {}]
  %s2 = inlined_call_operand.vmem [shape: f32[3,3,4,128], index: 2, kind: input, shape index: {}]
  %s3 = inlined_call_operand.vmem [shape: f32[1,128], index: 3, kind: input, shape index: {}]
  %s4 = inlined_call_operand.hbm [shape: f32[2,14,16,128], index: 4, kind: output, shape index: {}]
  %s5 = sld [smem:[#allocation0]]
  $region49: #{tpu_custom_call.1} parent=0
    _
  %s7 = ssub.s32 1, %s5
  %s8 = scalar_select 0, %s7, %s5
  $region1: #{tpu_custom_call.1} parent=0
    #allocation2 [shape = 'u8[229376]{0}', space=vmem, size = 0x38000, scoped, tag = 'output window, operand 0']
    #allocation3 [shape = 's32[2]{0}', space=sflag, size = 0x8, scoped, tag = 'scoped memory for tpu_custom_call.1']
    %9 = vsyncpa [#allocation3], 0
    %s10 = scalar_lea.sflag [#allocation3], 1
    %11 = vsyncpa %s10, 0
    loop: start=0, step=1, limit=4
    $region2: #{tpu_custom_call.1} parent=1 // loop_pre_header
      _
    $region3: #{tpu_custom_call.1} parent=1 // loop_header
      %s13 = sphi 0, %s17
      %p14 = scmp.ge.s32.totalorder %s13, 4
      %s20 = sphi 0, %s32
      %s21 = sphi 0, %s28
      %s22 = sphi 0, %s20
      %s23 = sphi 0, %s21
      %s24 = sphi 0, %s22
      %s25 = sphi 0, %s23
      %s37 = sphi 0, %s39
      %s40 = sphi 0, %s37
      %s41 = sphi 0, %s40
      %s57 = sphi 0, %s41
      %s67 = sphi 0, %s69
      %s70 = sphi 0, %s67
      %s71 = sphi 0, %s70
      %s87 = sphi 0, %s71
      %s91 = sphi 0, %s91
      %s93 = sphi 0, %s91
      %s94 = sphi 0, %s93
      %s108 = sphi 0, %s94
      %s112 = sphi 0, %s112
      %s114 = sphi 0, %s112
      %s115 = sphi 0, %s114
      %s129 = sphi 0, %s115
      %s137 = sphi 0, %s139
      %s140 = sphi 0, %s137
      %s141 = sphi 0, %s140
      %s157 = sphi 0, %s141
    $region4: #{tpu_custom_call.1} parent=1 // loop_header_branch
      %16 = sbr.rel (%p14) target = $region8
    $region5: #{tpu_custom_call.1} parent=1 // loop_body
      %s18 = ssub.s32 %s13, 1
      %s19 = ssub.s32 %s13, 2
      %s26 = sadd.s32 1, %s21
      %p27 = scmp.ge.s32.totalorder %s26, 1
      %s28 = scalar_select %p27, 0, %s26
      %s29 = sadd.s32 1, %s20
      %s30 = scalar_select %p27, %s29, %s20
      %p31 = scmp.ge.s32.totalorder %s30, 2
      %s32 = scalar_select %p31, 0, %s30
      %s33 = ssub.s32 %s20, %s32
      %s34 = ssub.s32 %s21, %s28
      %s35 = sor.u32 %s33, %s34
      %p36 = scmp.eq.s32.totalorder %s35, 0
      %s38 = sadd.s32 %s37, 1
      %s39 = scalar_select %p36, %s37, %s38
      %p42 = pneg %p36
      %p43 = scmp.eq.s32.totalorder %s13, 1
      %p44 = por %p42, %p43
      %p45 = scmp.ne.s32.totalorder %s37, %s40
      %p46 = scmp.eq.s32.totalorder %s13, 0
      %p47 = por %p45, %p46
      %p48 = scmp.ne.s32.totalorder %s37, %s40
      %p49 = scmp.eq.s32.totalorder %s18, 1
      %p50 = por %p48, %p49
      %p51 = scmp.ne.s32.totalorder %s40, %s41
      %p52 = scmp.eq.s32.totalorder %s18, 0
      %p53 = por %p51, %p52
      %p54 = scmp.ne.s32.totalorder %s40, %s41
      %p55 = scmp.eq.s32.totalorder %s19, 1
      %p56 = por %p54, %p55
      %p58 = scmp.ne.s32.totalorder %s41, %s57
      %p59 = scmp.eq.s32.totalorder %s19, 0
      %p60 = por %p58, %p59
      %s61 = sadd.s32 %s21, 1
      %s62 = sadd.s32 %s28, 1
      %s63 = ssub.s32 %s20, %s32
      %s64 = ssub.s32 %s61, %s62
      %s65 = sor.u32 %s63, %s64
      %p66 = scmp.eq.s32.totalorder %s65, 0
      %s68 = sadd.s32 %s67, 1
      %s69 = scalar_select %p66, %s67, %s68
      %p72 = pneg %p66
      %p73 = scmp.eq.s32.totalorder %s13, 1
      %p74 = por %p72, %p73
      %p75 = scmp.ne.s32.totalorder %s67, %s70
      %p76 = scmp.eq.s32.totalorder %s13, 0
      %p77 = por %p75, %p76
      %p78 = scmp.ne.s32.totalorder %s67, %s70
      %p79 = scmp.eq.s32.totalorder %s18, 1
      %p80 = por %p78, %p79
      %p81 = scmp.ne.s32.totalorder %s70, %s71
      %p82 = scmp.eq.s32.totalorder %s18, 0
      %p83 = por %p81, %p82
      %p84 = scmp.ne.s32.totalorder %s70, %s71
      %p85 = scmp.eq.s32.totalorder %s19, 1
      %p86 = por %p84, %p85
      %p88 = scmp.ne.s32.totalorder %s71, %s87
      %p89 = scmp.eq.s32.totalorder %s19, 0
      %p90 = por %p88, %p89
      %s92 = sadd.s32 %s91, 1
      %p95 = scmp.eq.s32.totalorder %s13, 1
      %p96 = scmp.ne.s32.totalorder %s91, %s93
      %p97 = scmp.eq.s32.totalorder %s13, 0
      %p98 = por %p96, %p97
      %p99 = scmp.ne.s32.totalorder %s91, %s93
      %p100 = scmp.eq.s32.totalorder %s18, 1
      %p101 = por %p99, %p100
      %p102 = scmp.ne.s32.totalorder %s93, %s94
      %p103 = scmp.eq.s32.totalorder %s18, 0
      %p104 = por %p102, %p103
      %p105 = scmp.ne.s32.totalorder %s93, %s94
      %p106 = scmp.eq.s32.totalorder %s19, 1
      %p107 = por %p105, %p106
      %p109 = scmp.ne.s32.totalorder %s94, %s108
      %p110 = scmp.eq.s32.totalorder %s19, 0
      %p111 = por %p109, %p110
      %s113 = sadd.s32 %s112, 1
      %p116 = scmp.eq.s32.totalorder %s13, 1
      %p117 = scmp.ne.s32.totalorder %s112, %s114
      %p118 = scmp.eq.s32.totalorder %s13, 0
      %p119 = por %p117, %p118
      %p120 = scmp.ne.s32.totalorder %s112, %s114
      %p121 = scmp.eq.s32.totalorder %s18, 1
      %p122 = por %p120, %p121
      %p123 = scmp.ne.s32.totalorder %s114, %s115
      %p124 = scmp.eq.s32.totalorder %s18, 0
      %p125 = por %p123, %p124
      %p126 = scmp.ne.s32.totalorder %s114, %s115
      %p127 = scmp.eq.s32.totalorder %s19, 1
      %p128 = por %p126, %p127
      %p130 = scmp.ne.s32.totalorder %s115, %s129
      %p131 = scmp.eq.s32.totalorder %s19, 0
      %p132 = por %p130, %p131
      %s133 = ssub.s32 %s20, %s32
      %s134 = ssub.s32 %s21, %s28
      %s135 = sor.u32 %s133, %s134
      %p136 = scmp.eq.s32.totalorder %s135, 0
      %s138 = sadd.s32 %s137, 1
      %s139 = scalar_select %p136, %s137, %s138
      %p142 = pneg %p136
      %p143 = scmp.eq.s32.totalorder %s13, 1
      %p144 = por %p142, %p143
      %p145 = scmp.ne.s32.totalorder %s137, %s140
      %p146 = scmp.eq.s32.totalorder %s13, 0
      %p147 = por %p145, %p146
      %p148 = scmp.ne.s32.totalorder %s137, %s140
      %p149 = scmp.eq.s32.totalorder %s18, 1
      %p150 = por %p148, %p149
      %p151 = scmp.ne.s32.totalorder %s140, %s141
      %p152 = scmp.eq.s32.totalorder %s18, 0
      %p153 = por %p151, %p152
      %p154 = scmp.ne.s32.totalorder %s140, %s141
      %p155 = scmp.eq.s32.totalorder %s19, 1
      %p156 = por %p154, %p155
      %p158 = scmp.ne.s32.totalorder %s141, %s157
      %p159 = scmp.eq.s32.totalorder %s19, 0
      %p160 = por %p158, %p159
      %p161 = scmp.le.s32.totalorder 1, %s13
      %p162 = scmp.lt.s32.totalorder %s13, 3
      %p163 = pnand %p161, %p162
      %p164 = pneg %p163
      // Predicated region
      $region9: #{tpu_custom_call.1} parent=5 // pred_check
        _
      $region10: #{tpu_custom_call.1} parent=5 // pred_check_branch
        %166 = sbr.rel (%p163) target = $region12
      $region11: #{tpu_custom_call.1} parent=5 // pred_region
        %s167 = ssub.s32 %s13, 1
        // Predicated region
        $region13: #{tpu_custom_call.1} parent=11 // pred_check
          %p168 = pneg %p104
        $region14: #{tpu_custom_call.1} parent=11 // pred_check_branch
          %170 = sbr.rel (%p168) target = $region16
        $region15: #{tpu_custom_call.1} parent=11 // pred_region
          _
        $region16: #{tpu_custom_call.1} parent=11 // pred_fallthru
          _
        // Predicated region
        $region17: #{tpu_custom_call.1} parent=11 // pred_check
          %p171 = pneg %p125
        $region18: #{tpu_custom_call.1} parent=11 // pred_check_branch
          %173 = sbr.rel (%p171) target = $region20
        $region19: #{tpu_custom_call.1} parent=11 // pred_region
          _
        $region20: #{tpu_custom_call.1} parent=11 // pred_fallthru
          _
      $region12: #{tpu_custom_call.1} parent=5 // pred_fallthru
        _
      %p174 = scmp.lt.s32.totalorder %s13, 2
      // Predicated region
      $region21: #{tpu_custom_call.1} parent=5 // pred_check
        %p175 = pneg %p174
      $region22: #{tpu_custom_call.1} parent=5 // pred_check_branch
        %177 = sbr.rel (%p175) target = $region24
      $region23: #{tpu_custom_call.1} parent=5 // pred_region
        // Predicated region
        $region25: #{tpu_custom_call.1} parent=23 // pred_check
          %p178 = pneg %p47
        $region26: #{tpu_custom_call.1} parent=23 // pred_check_branch
          %180 = sbr.rel (%p178) target = $region28
        $region27: #{tpu_custom_call.1} parent=23 // pred_region
          %s181 = smul.u32 14, %s21
          %p182 = scmp.lt.s32.totalorder %s20, 1
          %s183 = scalar_select %p182, %s20, 1
          %p184 = scmp.lt.s32.totalorder %s181, 27
          %s185 = scalar_select %p184, %s181, 27
          %s186 = smul.addr %s185, 3
          %s187 = smul.addr %s183, 84
          %s188 = sadd.s32 %s186, %s187
          %s189 = smul.addr %s188, 8
          %s190 = scalar_lea.vmem %s0, %s189
          %s191 = smul.u32 14, %s21
        $region28: #{tpu_custom_call.1} parent=23 // pred_fallthru
          _
        // Predicated region
        $region29: #{tpu_custom_call.1} parent=23 // pred_check
          %p192 = pneg %p77
        $region30: #{tpu_custom_call.1} parent=23 // pred_check_branch
          %194 = sbr.rel (%p192) target = $region32
        $region31: #{tpu_custom_call.1} parent=23 // pred_region
          %s195 = sadd.s32 %s21, 1
          %s196 = smul.u32 14, %s195
          %p197 = scmp.lt.s32.totalorder %s20, 1
          %s198 = scalar_select %p197, %s20, 1
          %p199 = scmp.lt.s32.totalorder %s196, 27
          %s200 = scalar_select %p199, %s196, 27
          %s201 = smul.addr %s200, 3
          %s202 = smul.addr %s198, 84
          %s203 = sadd.s32 %s201, %s202
          %s204 = smul.addr %s203, 8
          %s205 = scalar_lea.vmem %s1, %s204
          %s206 = sadd.s32 %s21, 1
          %s207 = smul.u32 14, %s206
        $region32: #{tpu_custom_call.1} parent=23 // pred_fallthru
          _
      $region24: #{tpu_custom_call.1} parent=5 // pred_fallthru
        _
      %p208 = scmp.le.s32.totalorder 1, %s13
      %p209 = scmp.lt.s32.totalorder %s13, 3
      %p210 = pnand %p208, %p209
      %p211 = pneg %p210
      // Predicated region
      $region33: #{tpu_custom_call.1} parent=5 // pred_check
        _
      $region34: #{tpu_custom_call.1} parent=5 // pred_check_branch
        %213 = sbr.rel (%p210) target = $region36
      $region35: #{tpu_custom_call.1} parent=5 // pred_region
        %s214 = ssub.s32 %s13, 1
        %s215 = smul.u32 14, %s23
        %p216 = scmp.lt.s32.totalorder %s22, 1
        %s217 = scalar_select %p216, %s22, 1
        %p218 = scmp.lt.s32.totalorder %s215, 27
        %s219 = scalar_select %p218, %s215, 27
        %s220 = smul.addr %s219, 3
        %s221 = smul.addr %s217, 84
        %s222 = sadd.s32 %s220, %s221
        %s223 = smul.addr %s222, 8
        %s224 = scalar_lea.vmem %s0, %s223
        %p225 = pneg %p53
        %p226 = pneg %p50
        %s227 = sadd.s32 %s23, 1
        %s228 = smul.u32 14, %s227
        %p229 = scmp.lt.s32.totalorder %s22, 1
        %s230 = scalar_select %p229, %s22, 1
        %p231 = scmp.lt.s32.totalorder %s228, 27
        %s232 = scalar_select %p231, %s228, 27
        %s233 = smul.addr %s232, 3
        %s234 = smul.addr %s230, 84
        %s235 = sadd.s32 %s233, %s234
        %s236 = smul.addr %s235, 8
        %s237 = scalar_lea.vmem %s1, %s236
        %p238 = pneg %p83
        %p239 = pneg %p80
        %p240 = pneg %p104
        %p241 = pneg %p101
        %p242 = pneg %p125
        %p243 = pneg %p122
        %p244 = pneg %p153
        %p245 = pneg %p150
        %s246 = sand.u32 %s140, 1
        %s247 = scalar_lea.sflag [#allocation3], %s246
        %s248 = sand.u32 %s140, 1
        %s249 = smul.addr %s248, 224
        %s250 = scalar_lea.vmem [#allocation2], %s249
        %s251 = smul.u32 14, %s23
        %p252 = scmp.lt.s32.totalorder %s22, 1
        %s253 = scalar_select %p252, %s22, 1
        %p254 = scmp.lt.s32.totalorder %s251, 27
        %s255 = scalar_select %p254, %s251, 27
        %s256 = smul.addr %s255, 3
        %s257 = smul.addr %s253, 84
        %s258 = sadd.s32 %s256, %s257
        %s259 = smul.addr %s258, 8
        %s260 = scalar_lea.vmem %s0, %s259
        %s261 = smul.u32 14, %s23
        %s262 = sadd.s32 %s23, 1
        %s263 = smul.u32 14, %s262
        %p264 = scmp.lt.s32.totalorder %s22, 1
        %s265 = scalar_select %p264, %s22, 1
        %p266 = scmp.lt.s32.totalorder %s263, 27
        %s267 = scalar_select %p266, %s263, 27
        %s268 = smul.addr %s267, 3
        %s269 = smul.addr %s265, 84
        %s270 = sadd.s32 %s268, %s269
        %s271 = smul.addr %s270, 8
        %s272 = scalar_lea.vmem %s1, %s271
        %s273 = sadd.s32 %s23, 1
        %s274 = smul.u32 14, %s273
        %s275 = smul.u32 14, %s23
        %v276 = vld [vmem:[%s260] sm:$0xff]
        %v277 = vld [vmem:[%s260 + $0x8] sm:$0xff]
        %v278 = vld [vmem:[%s260 + $0x10] sm:$0x3]
        %v279 = vld [vmem:[%s260 + $0x18] sm:$0xff]
        %v280 = vld [vmem:[%s260 + $0x20] sm:$0xff]
        %v281 = vld [vmem:[%s260 + $0x28] sm:$0x3]
        %v282 = vld [vmem:[%s260 + $0x30] sm:$0xff]
        %v283 = vld [vmem:[%s260 + $0x38] sm:$0xff]
        %v284 = vld [vmem:[%s260 + $0x40] sm:$0x3]
        %v285 = vld [vmem:[%s260 + $0x48] sm:$0xff]
        %v286 = vld [vmem:[%s260 + $0x50] sm:$0xff]
        %v287 = vld [vmem:[%s260 + $0x58] sm:$0x3]
        %v288 = vld [vmem:[%s260 + $0x60] sm:$0xff]
        %v289 = vld [vmem:[%s260 + $0x68] sm:$0xff]
        %v290 = vld [vmem:[%s260 + $0x70] sm:$0x3]
        %v291 = vld [vmem:[%s260 + $0x78] sm:$0xff]
        %v292 = vld [vmem:[%s260 + $0x80] sm:$0xff]
        %v293 = vld [vmem:[%s260 + $0x88] sm:$0x3]
        %v294 = vld [vmem:[%s260 + $0x90] sm:$0xff]
        %v295 = vld [vmem:[%s260 + $0x98] sm:$0xff]
        %v296 = vld [vmem:[%s260 + $0xa0] sm:$0x3]
        %v297 = vld [vmem:[%s260 + $0xa8] sm:$0xff]
        %v298 = vld [vmem:[%s260 + $0xb0] sm:$0xff]
        %v299 = vld [vmem:[%s260 + $0xb8] sm:$0x3]
        %v300 = vld [vmem:[%s260 + $0xc0] sm:$0xff]
        %v301 = vld [vmem:[%s260 + $0xc8] sm:$0xff]
        %v302 = vld [vmem:[%s260 + $0xd0] sm:$0x3]
        %v303 = vld [vmem:[%s260 + $0xd8] sm:$0xff]
        %v304 = vld [vmem:[%s260 + $0xe0] sm:$0xff]
        %v305 = vld [vmem:[%s260 + $0xe8] sm:$0x3]
        %v306 = vld [vmem:[%s260 + $0xf0] sm:$0xff]
        %v307 = vld [vmem:[%s260 + $0xf8] sm:$0xff]
        %v308 = vld [vmem:[%s260 + $0x100] sm:$0x3]
        %v309 = vld [vmem:[%s260 + $0x108] sm:$0xff]
        %v310 = vld [vmem:[%s260 + $0x110] sm:$0xff]
        %v311 = vld [vmem:[%s260 + $0x118] sm:$0x3]
        %v312 = vld [vmem:[%s260 + $0x120] sm:$0xff]
        %v313 = vld [vmem:[%s260 + $0x128] sm:$0xff]
        %v314 = vld [vmem:[%s260 + $0x130] sm:$0x3]
        %v315 = vld [vmem:[%s260 + $0x138] sm:$0xff]
        %v316 = vld [vmem:[%s260 + $0x140] sm:$0xff]
        %v317 = vld [vmem:[%s260 + $0x148] sm:$0x3]
        %v318 = vld [vmem:[%s272] sm:$0xff]
        %v319 = vld [vmem:[%s272 + $0x8] sm:$0xff]
        %v320 = vld [vmem:[%s272 + $0x10] sm:$0x3]
        %v321 = vld [vmem:[%s272 + $0x18] sm:$0xff]
        %v322 = vld [vmem:[%s272 + $0x20] sm:$0xff]
        %v323 = vld [vmem:[%s272 + $0x28] sm:$0x3]
        %v324 = vld [vmem:[%s2] sm:$0xf]
        %vm367 = vcmask 1046528
        %v368 = vrot.slane %v276, 1
        %v369 = vrot.slane %v277, 1
        %v370 = vsel %vm367, %v368, %v369
        %v371 = vrot.slane %v278, 1
        %v372 = vsel %vm367, %v369, %v371
        %v373 = vrot.slane %v279, 1
        %v374 = vrot.slane %v280, 1
        %v375 = vsel %vm367, %v373, %v374
        %v376 = vrot.slane %v281, 1
        %v377 = vsel %vm367, %v374, %v376
        %v378 = vrot.slane %v282, 1
        %v379 = vrot.slane %v283, 1
        %v380 = vsel %vm367, %v378, %v379
        %v381 = vrot.slane %v284, 1
        %v382 = vsel %vm367, %v379, %v381
        %v383 = vrot.slane %v285, 1
        %v384 = vrot.slane %v286, 1
        %v385 = vsel %vm367, %v383, %v384
        %v386 = vrot.slane %v287, 1
        %v387 = vsel %vm367, %v384, %v386
        %v388 = vrot.slane %v288, 1
        %v389 = vrot.slane %v289, 1
        %v390 = vsel %vm367, %v388, %v389
        %v391 = vrot.slane %v290, 1
        %v392 = vsel %vm367, %v389, %v391
        %v393 = vrot.slane %v291, 1
        %v394 = vrot.slane %v292, 1
        %v395 = vsel %vm367, %v393, %v394
        %v396 = vrot.slane %v293, 1
        %v397 = vsel %vm367, %v394, %v396
        %v398 = vrot.slane %v294, 1
        %v399 = vrot.slane %v295, 1
        %v400 = vsel %vm367, %v398, %v399
        %v401 = vrot.slane %v296, 1
        %v402 = vsel %vm367, %v399, %v401
        %v403 = vrot.slane %v297, 1
        %v404 = vrot.slane %v298, 1
        %v405 = vsel %vm367, %v403, %v404
        %v406 = vrot.slane %v299, 1
        %v407 = vsel %vm367, %v404, %v406
        %v408 = vrot.slane %v300, 1
        %v409 = vrot.slane %v301, 1
        %v410 = vsel %vm367, %v408, %v409
        %v411 = vrot.slane %v302, 1
        %v412 = vsel %vm367, %v409, %v411
        %v413 = vrot.slane %v303, 1
        %v414 = vrot.slane %v304, 1
        %v415 = vsel %vm367, %v413, %v414
        %v416 = vrot.slane %v305, 1
        %v417 = vsel %vm367, %v414, %v416
        %v418 = vrot.slane %v306, 1
        %v419 = vrot.slane %v307, 1
        %v420 = vsel %vm367, %v418, %v419
        %v421 = vrot.slane %v308, 1
        %v422 = vsel %vm367, %v419, %v421
        %v423 = vrot.slane %v309, 1
        %v424 = vrot.slane %v310, 1
        %v425 = vsel %vm367, %v423, %v424
        %v426 = vrot.slane %v311, 1
        %v427 = vsel %vm367, %v424, %v426
        %v428 = vrot.slane %v312, 1
        %v429 = vrot.slane %v313, 1
        %v430 = vsel %vm367, %v428, %v429
        %v431 = vrot.slane %v314, 1
        %v432 = vsel %vm367, %v429, %v431
        %v433 = vrot.slane %v315, 1
        %v434 = vrot.slane %v316, 1
        %v435 = vsel %vm367, %v433, %v434
        %v436 = vrot.slane %v317, 1
        %v437 = vsel %vm367, %v434, %v436
        %s438 = scalar_lea.vmem %s2, 4
        %v439 = vld [vmem:[%s438] sm:$0xf]
        %vm440 = vcmask 31744
        %v441 = vsel %vm440, %v370, 0
        %v443 = vsel %vm440, %v372, 0
        %v445 = vsel %vm440, %v375, 0
        %v447 = vsel %vm440, %v377, 0
        %v449 = vsel %vm440, %v380, 0
        %v451 = vsel %vm440, %v382, 0
        %v453 = vsel %vm440, %v385, 0
        %v455 = vsel %vm440, %v387, 0
        %v457 = vsel %vm440, %v390, 0
        %v459 = vsel %vm440, %v392, 0
        %v461 = vsel %vm440, %v395, 0
        %v463 = vsel %vm440, %v397, 0
        %v465 = vsel %vm440, %v400, 0
        %v467 = vsel %vm440, %v402, 0
        %v469 = vsel %vm440, %v405, 0
        %v471 = vsel %vm440, %v407, 0
        %v473 = vsel %vm440, %v410, 0
        %v475 = vsel %vm440, %v412, 0
        %v477 = vsel %vm440, %v415, 0
        %v479 = vsel %vm440, %v417, 0
        %v481 = vsel %vm440, %v420, 0
        %v483 = vsel %vm440, %v422, 0
        %v485 = vsel %vm440, %v425, 0
        %v487 = vsel %vm440, %v427, 0
        %v489 = vsel %vm440, %v430, 0
        %v491 = vsel %vm440, %v432, 0
        %v493 = vsel %vm440, %v435, 0
        %v495 = vsel %vm440, %v437, 0
        %vm497 = vcmask 1043456
        %v499 = vsel %vm497, %v439, 0
        %501 = vmatprep.subr.mxu0 0.0
        %502 = vmatpush1.msra.mxu0 %v499
        %503 = vmatprep.subr.mxu0 0.0
        %504 = vmatpush1.msra.mxu0 0.0
        %505 = vmatprep.subr.mxu0 0.0
        %506 = vmatpush1.msra.mxu0 0.0
        %507 = vmatprep.subr.mxu0 0.0
        %508 = vmatpush1.msra.mxu0 0.0
        %509 = vmatprep.subr.mxu0 0.0
        %510 = vmatpush1.msra.mxu0 0.0
        %511 = vmatprep.subr.mxu0 0.0
        %512 = vmatpush1.msra.mxu0 0.0
        %513 = vmatprep.subr.mxu0 0.0
        %514 = vmatpush1.msra.mxu0 0.0
        %515 = vmatprep.subr.mxu0 0.0
        %516 = vmatpush1.msra.mxu0 0.0
        %517 = vmatprep.subr.mxu0 0.0
        %518 = vmatpush1.msra.mxu0 0.0
        %519 = vmatprep.subr.mxu0 0.0
        %520 = vmatpush1.msra.mxu0 0.0
        %521 = vmatprep.subr.mxu0 0.0
        %522 = vmatpush1.msra.mxu0 0.0
        %523 = vmatprep.subr.mxu0 0.0
        %524 = vmatpush1.msra.mxu0 0.0
        %525 = vmatprep.subr.mxu0 0.0
        %526 = vmatpush1.msra.mxu0 0.0
        %527 = vmatprep.subr.mxu0 0.0
        %528 = vmatpush1.msra.mxu0 0.0
        %529 = vmatprep.subr.mxu0 0.0
        %530 = vmatpush1.msra.mxu0 0.0
        %531 = vmatprep.subr.mxu0 0.0
        %532 = vmatpush1.msra.mxu0 0.0
        %533 = vmatprep.subr.mxu0 0.0
        %534 = vmatpush1.msra.mxu0 0.0
        %535 = vmatprep.subr.mxu0 0.0
        %536 = vmatpush1.msra.mxu0 0.0
        %537 = vmatprep.subr.mxu0 0.0
        %538 = vmatpush1.msra.mxu0 0.0
        %539 = vmatprep.subr.mxu0 0.0
        %540 = vmatpush1.msra.mxu0 0.0
        %541 = vmatprep.subr.mxu0 0.0
        %542 = vmatpush1.msra.mxu0 0.0
        %543 = vmatprep.subr.mxu0 0.0
        %544 = vmatpush1.msra.mxu0 0.0
        %545 = vmatprep.subr.mxu0 0.0
        %546 = vmatpush1.msra.mxu0 0.0
        %547 = vmatprep.subr.mxu0 0.0
        %548 = vmatpush1.msra.mxu0 0.0
        %549 = vmatprep.subr.mxu0 0.0
        %550 = vmatpush1.msra.mxu0 0.0
        %551 = vmatprep.subr.mxu0 0.0
        %552 = vmatpush1.msra.mxu0 0.0
        %553 = vmatprep.subr.mxu0 0.0
        %554 = vmatpush1.msra.mxu0 0.0
        %555 = vmatprep.subr.mxu0 0.0
        %556 = vmatpush1.msra.mxu0 0.0
        %557 = vmatprep.subr.mxu0 0.0
        %558 = vmatpush1.msra.mxu0 0.0
        %559 = vmatprep.subr.mxu0 0.0
        %560 = vmatpush1.msra.mxu0 0.0
        %561 = vmatprep.subr.mxu0 0.0
        %562 = vmatpush1.msra.mxu0 0.0
        %563 = vmatprep.subr.mxu0 0.0
        %564 = vmatpush1.msra.mxu0 0.0
        %565 = vmatprep.mubr.f32.mxu0 0.0
        %566 = vmatmul.mubr.f32.gmra.mrb[0].mxu0 %v441
        %v567 = vpop.f32.mrb[0].mxu0
        %v568 = vadd.f32 0.0, %v567
        %v569 = vpop.f32.mrb[0].mxu0
        %570 = vmatprep.mubr.f32.mxu0 0.0
        %571 = vmatmul.mubr.f32.gmra.mrb[0].mxu0 %v443
        %v572 = vpop.f32.mrb[0].mxu0
        %v573 = vadd.f32 0.0, %v572
        %v574 = vpop.f32.mrb[0].mxu0
        %575 = vmatprep.mubr.f32.mxu0 0.0
        %576 = vmatmul.mubr.f32.gmra.mrb[0].mxu0 %v445
        %v577 = vpop.f32.mrb[0].mxu0
        %v578 = vadd.f32 0.0, %v577
        %v579 = vpop.f32.mrb[0].mxu0
        %580 = vmatprep.mubr.f32.mxu0 0.0
        %581 = vmatmul.mubr.f32.gmra.mrb[0].mxu0 %v447
        %v582 = vpop.f32.mrb[0].mxu0
        %v583 = vadd.f32 0.0, %v582
        %v584 = vpop.f32.mrb[0].mxu0
        %585 = vmatprep.mubr.f32.mxu0 0.0
        %586 = vmatmul.mubr.f32.gmra.mrb[0].mxu0 %v449
        %v587 = vpop.f32.mrb[0].mxu0
        %v588 = vadd.f32 0.0, %v587
        %v589 = vpop.f32.mrb[0].mxu0
        %590 = vmatprep.mubr.f32.mxu0 0.0
        %591 = vmatmul.mubr.f32.gmra.mrb[0].mxu0 %v451
        %v592 = vpop.f32.mrb[0].mxu0
        %v593 = vadd.f32 0.0, %v592
        %v594 = vpop.f32.mrb[0].mxu0
        %595 = vmatprep.mubr.f32.mxu0 0.0
        %596 = vmatmul.mubr.f32.gmra.mrb[0].mxu0 %v453
        %v597 = vpop.f32.mrb[0].mxu0
        %v598 = vadd.f32 0.0, %v597
        %v599 = vpop.f32.mrb[0].mxu0
        %600 = vmatprep.mubr.f32.mxu0 0.0
        %601 = vmatmul.mubr.f32.gmra.mrb[0].mxu0 %v455
        %v602 = vpop.f32.mrb[0].mxu0
        %v603 = vadd.f32 0.0, %v602
        %v604 = vpop.f32.mrb[0].mxu0
        %605 = vmatprep.mubr.f32.mxu0 0.0
        %606 = vmatmul.mubr.f32.gmra.mrb[0].mxu0 %v457
        %v607 = vpop.f32.mrb[0].mxu0
        %v608 = vadd.f32 0.0, %v607
        %v609 = vpop.f32.mrb[0].mxu0
        %610 = vmatprep.mubr.f32.mxu0 0.0
        %611 = vmatmul.mubr.f32.gmra.mrb[0].mxu0 %v459
        %v612 = vpop.f32.mrb[0].mxu0
        %v613 = vadd.f32 0.0, %v612
        %v614 = vpop.f32.mrb[0].mxu0
        %615 = vmatprep.mubr.f32.mxu0 0.0
        %616 = vmatmul.mubr.f32.gmra.mrb[0].mxu0 %v461
        %v617 = vpop.f32.mrb[0].mxu0
        %v618 = vadd.f32 0.0, %v617
        %v619 = vpop.f32.mrb[0].mxu0
        %620 = vmatprep.mubr.f32.mxu0 0.0
        %621 = vmatmul.mubr.f32.gmra.mrb[0].mxu0 %v463
        %v622 = vpop.f32.mrb[0].mxu0
        %v623 = vadd.f32 0.0, %v622
        %v624 = vpop.f32.mrb[0].mxu0
        %625 = vmatprep.mubr.f32.mxu0 0.0
        %626 = vmatmul.mubr.f32.gmra.mrb[0].mxu0 %v465
        %v627 = vpop.f32.mrb[0].mxu0
        %v628 = vadd.f32 0.0, %v627
        %v629 = vpop.f32.mrb[0].mxu0
        %630 = vmatprep.mubr.f32.mxu0 0.0
        %631 = vmatmul.mubr.f32.gmra.mrb[0].mxu0 %v467
        %v632 = vpop.f32.mrb[0].mxu0
        %v633 = vadd.f32 0.0, %v632
        %v634 = vpop.f32.mrb[0].mxu0
        %635 = vmatprep.mubr.f32.mxu0 0.0
        %636 = vmatmul.mubr.f32.gmra.mrb[0].mxu0 %v469
        %v637 = vpop.f32.mrb[0].mxu0
        %v638 = vadd.f32 0.0, %v637
        %v639 = vpop.f32.mrb[0].mxu0
        %640 = vmatprep.mubr.f32.mxu0 0.0
        %641 = vmatmul.mubr.f32.gmra.mrb[0].mxu0 %v471
        %v642 = vpop.f32.mrb[0].mxu0
        %v643 = vadd.f32 0.0, %v642
        %v644 = vpop.f32.mrb[0].mxu0
        %645 = vmatprep.mubr.f32.mxu0 0.0
        %646 = vmatmul.mubr.f32.gmra.mrb[0].mxu0 %v473
        %v647 = vpop.f32.mrb[0].mxu0
        %v648 = vadd.f32 0.0, %v647
        %v649 = vpop.f32.mrb[0].mxu0
        %650 = vmatprep.mubr.f32.mxu0 0.0
        %651 = vmatmul.mubr.f32.gmra.mrb[0].mxu0 %v475
        %v652 = vpop.f32.mrb[0].mxu0
        %v653 = vadd.f32 0.0, %v652
        %v654 = vpop.f32.mrb[0].mxu0
        %655 = vmatprep.mubr.f32.mxu0 0.0
        %656 = vmatmul.mubr.f32.gmra.mrb[0].mxu0 %v477
        %v657 = vpop.f32.mrb[0].mxu0
        %v658 = vadd.f32 0.0, %v657
        %v659 = vpop.f32.mrb[0].mxu0
        %660 = vmatprep.mubr.f32.mxu0 0.0
        %661 = vmatmul.mubr.f32.gmra.mrb[0].mxu0 %v479
        %v662 = vpop.f32.mrb[0].mxu0
        %v663 = vadd.f32 0.0, %v662
        %v664 = vpop.f32.mrb[0].mxu0
        %665 = vmatprep.mubr.f32.mxu0 0.0
        %666 = vmatmul.mubr.f32.gmra.mrb[0].mxu0 %v481
        %v667 = vpop.f32.mrb[0].mxu0
        %v668 = vadd.f32 0.0, %v667
        %v669 = vpop.f32.mrb[0].mxu0
        %670 = vmatprep.mubr.f32.mxu0 0.0
        %671 = vmatmul.mubr.f32.gmra.mrb[0].mxu0 %v483
        %v672 = vpop.f32.mrb[0].mxu0
        %v673 = vadd.f32 0.0, %v672
        %v674 = vpop.f32.mrb[0].mxu0
        %675 = vmatprep.mubr.f32.mxu0 0.0
        %676 = vmatmul.mubr.f32.gmra.mrb[0].mxu0 %v485
        %v677 = vpop.f32.mrb[0].mxu0
        %v678 = vadd.f32 0.0, %v677
        %v679 = vpop.f32.mrb[0].mxu0
        %680 = vmatprep.mubr.f32.mxu0 0.0
        %681 = vmatmul.mubr.f32.gmra.mrb[0].mxu0 %v487
        %v682 = vpop.f32.mrb[0].mxu0
        %v683 = vadd.f32 0.0, %v682
        %v684 = vpop.f32.mrb[0].mxu0
        %685 = vmatprep.mubr.f32.mxu0 0.0
        %686 = vmatmul.mubr.f32.gmra.mrb[0].mxu0 %v489
        %v687 = vpop.f32.mrb[0].mxu0
        %v688 = vadd.f32 0.0, %v687
        %v689 = vpop.f32.mrb[0].mxu0
        %690 = vmatprep.mubr.f32.mxu0 0.0
        %691 = vmatmul.mubr.f32.gmra.mrb[0].mxu0 %v491
        %v692 = vpop.f32.mrb[0].mxu0
        %v693 = vadd.f32 0.0, %v692
        %v694 = vpop.f32.mrb[0].mxu0
        %695 = vmatprep.mubr.f32.mxu0 0.0
        %696 = vmatmul.mubr.f32.gmra.mrb[0].mxu0 %v493
        %v697 = vpop.f32.mrb[0].mxu0
        %v698 = vadd.f32 0.0, %v697
        %v699 = vpop.f32.mrb[0].mxu0
        %700 = vmatprep.mubr.f32.mxu0 0.0
        %701 = vmatmul.mubr.f32.gmra.mrb[0].mxu0 %v495
        %v702 = vpop.f32.mrb[0].mxu0
        %v703 = vadd.f32 0.0, %v702
        %v704 = vpop.f32.mrb[0].mxu0
        %705 = vdwg.mxu0
        %v706 = vsel %vm440, %v276, 0
        %v708 = vsel %vm440, %v277, 0
        %v710 = vsel %vm440, %v279, 0
        %v712 = vsel %vm440, %v280, 0
        %v714 = vsel %vm440, %v282, 0
        %v716 = vsel %vm440, %v283, 0
        %v718 = vsel %vm440, %v285, 0
        %v720 = vsel %vm440, %v286, 0
        %v722 = vsel %vm440, %v288, 0
        %v724 = vsel %vm440, %v289, 0
        %v726 = vsel %vm440, %v291, 0
        %v728 = vsel %vm440, %v292, 0
        %v730 = vsel %vm440, %v294, 0
        %v732 = vsel %vm440, %v295, 0
        %v734 = vsel %vm440, %v297, 0
        %v736 = vsel %vm440, %v298, 0
        %v738 = vsel %vm440, %v300, 0
        %v740 = vsel %vm440, %v301, 0
        %v742 = vsel %vm440, %v303, 0
        %v744 = vsel %vm440, %v304, 0
        %v746 = vsel %vm440, %v306, 0
        %v748 = vsel %vm440, %v307, 0
        %v750 = vsel %vm440, %v309, 0
        %v752 = vsel %vm440, %v310, 0
        %v754 = vsel %vm440, %v312, 0
        %v756 = vsel %vm440, %v313, 0
        %v758 = vsel %vm440, %v315, 0
        %v760 = vsel %vm440, %v316, 0
        %v763 = vsel %vm497, %v324, 0
        %765 = vmatprep.subr.mxu0 0.0
        %766 = vmatpush1.msra.mxu0 %v763
        %767 = vmatprep.subr.mxu0 0.0
        %768 = vmatpush1.msra.mxu0 0.0
        %769 = vmatprep.subr.mxu0 0.0
        %770 = vmatpush1.msra.mxu0 0.0
        %771 = vmatprep.subr.mxu0 0.0
        %772 = vmatpush1.msra.mxu0 0.0
        %773 = vmatprep.subr.mxu0 0.0
        %774 = vmatpush1.msra.mxu0 0.0
        %775 = vmatprep.subr.mxu0 0.0
        %776 = vmatpush1.msra.mxu0 0.0
        %777 = vmatprep.subr.mxu0 0.0
        %778 = vmatpush1.msra.mxu0 0.0
        %779 = vmatprep.subr.mxu0 0.0
        %780 = vmatpush1.msra.mxu0 0.0
        %781 = vmatprep.subr.mxu0 0.0
        %782 = vmatpush1.msra.mxu0 0.0
        %783 = vmatprep.subr.mxu0 0.0
        %784 = vmatpush1.msra.mxu0 0.0
        %785 = vmatprep.subr.mxu0 0.0
        %786 = vmatpush1.msra.mxu0 0.0
        %787 = vmatprep.subr.mxu0 0.0
        %788 = vmatpush1.msra.mxu0 0.0
        %789 = vmatprep.subr.mxu0 0.0
        %790 = vmatpush1.msra.mxu0 0.0
        %791 = vmatprep.subr.mxu0 0.0
        %792 = vmatpush1.msra.mxu0 0.0
        %793 = vmatprep.subr.mxu0 0.0
        %794 = vmatpush1.msra.mxu0 0.0
        %795 = vmatprep.subr.mxu0 0.0
        %796 = vmatpush1.msra.mxu0 0.0
        %797 = vmatprep.subr.mxu0 0.0
        %798 = vmatpush1.msra.mxu0 0.0
        %799 = vmatprep.subr.mxu0 0.0
        %800 = vmatpush1.msra.mxu0 0.0
        %801 = vmatprep.subr.mxu0 0.0
        %802 = vmatpush1.msra.mxu0 0.0
        %803 = vmatprep.subr.mxu0 0.0
        %804 = vmatpush1.msra.mxu0 0.0
        %805 = vmatprep.subr.mxu0 0.0
        %806 = vmatpush1.msra.mxu0 0.0
        %807 = vmatprep.subr.mxu0 0.0
        %808 = vmatpush1.msra.mxu0 0.0
        %809 = vmatprep.subr.mxu0 0.0
        %810 = vmatpush1.msra.mxu0 0.0
        %811 = vmatprep.subr.mxu0 0.0
        %812 = vmatpush1.msra.mxu0 0.0
        %813 = vmatprep.subr.mxu0 0.0
        %814 = vmatpush1.msra.mxu0 0.0
        %815 = vmatprep.subr.mxu0 0.0
        %816 = vmatpush1.msra.mxu0 0.0
        %817 = vmatprep.subr.mxu0 0.0
        %818 = vmatpush1.msra.mxu0 0.0
        %819 = vmatprep.subr.mxu0 0.0
        %820 = vmatpush1.msra.mxu0 0.0
        %821 = vmatprep.subr.mxu0 0.0
        %822 = vmatpush1.msra.mxu0 0.0
        %823 = vmatprep.subr.mxu0 0.0
        %824 = vmatpush1.msra.mxu0 0.0
        %825 = vmatprep.subr.mxu0 0.0
        %826 = vmatpush1.msra.mxu0 0.0
        %827 = vmatprep.subr.mxu0 0.0
        %828 = vmatpush1.msra.mxu0 0.0
        %829 = vmatprep.mubr.f32.mxu0 0.0
        %830 = vmatmul.mubr.f32.gmra.mrb[0].mxu0 %v706
        %v831 = vpop.f32.mrb[0].mxu0
        %v832 = vadd.f32 %v568, %v831
        %v833 = vpop.f32.mrb[0].mxu0
        %834 = vmatprep.mubr.f32.mxu0 0.0
        %835 = vmatmul.mubr.f32.gmra.mrb[0].mxu0 %v708
        %v836 = vpop.f32.mrb[0].mxu0
        %v837 = vadd.f32 %v573, %v836
        %v838 = vpop.f32.mrb[0].mxu0
        %839 = vmatprep.mubr.f32.mxu0 0.0
        %840 = vmatmul.mubr.f32.gmra.mrb[0].mxu0 %v710
        %v841 = vpop.f32.mrb[0].mxu0
        %v842 = vadd.f32 %v578, %v841
        %v843 = vpop.f32.mrb[0].mxu0
        %844 = vmatprep.mubr.f32.mxu0 0.0
        %845 = vmatmul.mubr.f32.gmra.mrb[0].mxu0 %v712
        %v846 = vpop.f32.mrb[0].mxu0
        %v847 = vadd.f32 %v583, %v846
        %v848 = vpop.f32.mrb[0].mxu0
        %849 = vmatprep.mubr.f32.mxu0 0.0
        %850 = vmatmul.mubr.f32.gmra.mrb[0].mxu0 %v714
        %v851 = vpop.f32.mrb[0].mxu0
        %v852 = vadd.f32 %v588, %v851
        %v853 = vpop.f32.mrb[0].mxu0
        %854 = vmatprep.mubr.f32.mxu0 0.0
        %855 = vmatmul.mubr.f32.gmra.mrb[0].mxu0 %v716
        %v856 = vpop.f32.mrb[0].mxu0
        %v857 = vadd.f32 %v593, %v856
        %v858 = vpop.f32.mrb[0].mxu0
        %859 = vmatprep.mubr.f32.mxu0 0.0
        %860 = vmatmul.mubr.f32.gmra.mrb[0].mxu0 %v718
        %v861 = vpop.f32.mrb[0].mxu0
        %v862 = vadd.f32 %v598, %v861
        %v863 = vpop.f32.mrb[0].mxu0
        %864 = vmatprep.mubr.f32.mxu0 0.0
        %865 = vmatmul.mubr.f32.gmra.mrb[0].mxu0 %v720
        %v866 = vpop.f32.mrb[0].mxu0
        %v867 = vadd.f32 %v603, %v866
        %v868 = vpop.f32.mrb[0].mxu0
        %869 = vmatprep.mubr.f32.mxu0 0.0
        %870 = vmatmul.mubr.f32.gmra.mrb[0].mxu0 %v722
        %v871 = vpop.f32.mrb[0].mxu0
        %v872 = vadd.f32 %v608, %v871
        %v873 = vpop.f32.mrb[0].mxu0
        %874 = vmatprep.mubr.f32.mxu0 0.0
        %875 = vmatmul.mubr.f32.gmra.mrb[0].mxu0 %v724
        %v876 = vpop.f32.mrb[0].mxu0
        %v877 = vadd.f32 %v613, %v876
        %v878 = vpop.f32.mrb[0].mxu0
        %879 = vmatprep.mubr.f32.mxu0 0.0
        %880 = vmatmul.mubr.f32.gmra.mrb[0].mxu0 %v726
        %v881 = vpop.f32.mrb[0].mxu0
        %v882 = vadd.f32 %v618, %v881
        %v883 = vpop.f32.mrb[0].mxu0
        %884 = vmatprep.mubr.f32.mxu0 0.0
        %885 = vmatmul.mubr.f32.gmra.mrb[0].mxu0 %v728
        %v886 = vpop.f32.mrb[0].mxu0
        %v887 = vadd.f32 %v623, %v886
        %v888 = vpop.f32.mrb[0].mxu0
        %889 = vmatprep.mubr.f32.mxu0 0.0
        %890 = vmatmul.mubr.f32.gmra.mrb[0].mxu0 %v730
        %v891 = vpop.f32.mrb[0].mxu0
        %v892 = vadd.f32 %v628, %v891
        %v893 = vpop.f32.mrb[0].mxu0
        %894 = vmatprep.mubr.f32.mxu0 0.0
        %895 = vmatmul.mubr.f32.gmra.mrb[0].mxu0 %v732
        %v896 = vpop.f32.mrb[0].mxu0
        %v897 = vadd.f32 %v633, %v896
        %v898 = vpop.f32.mrb[0].mxu0
        %899 = vmatprep.mubr.f32.mxu0 0.0
        %900 = vmatmul.mubr.f32.gmra.mrb[0].mxu0 %v734
        %v901 = vpop.f32.mrb[0].mxu0
        %v902 = vadd.f32 %v638, %v901
        %v903 = vpop.f32.mrb[0].mxu0
        %904 = vmatprep.mubr.f32.mxu0 0.0
        %905 = vmatmul.mubr.f32.gmra.mrb[0].mxu0 %v736
        %v906 = vpop.f32.mrb[0].mxu0
        %v907 = vadd.f32 %v643, %v906
        %v908 = vpop.f32.mrb[0].mxu0
        %909 = vmatprep.mubr.f32.mxu0 0.0
        %910 = vmatmul.mubr.f32.gmra.mrb[0].mxu0 %v738
        %v911 = vpop.f32.mrb[0].mxu0
        %v912 = vadd.f32 %v648, %v911
        %v913 = vpop.f32.mrb[0].mxu0
        %914 = vmatprep.mubr.f32.mxu0 0.0
        %915 = vmatmul.mubr.f32.gmra.mrb[0].mxu0 %v740
        %v916 = vpop.f32.mrb[0].mxu0
        %v917 = vadd.f32 %v653, %v916
        %v918 = vpop.f32.mrb[0].mxu0
        %919 = vmatprep.mubr.f32.mxu0 0.0
        %920 = vmatmul.mubr.f32.gmra.mrb[0].mxu0 %v742
        %v921 = vpop.f32.mrb[0].mxu0
        %v922 = vadd.f32 %v658, %v921
        %v923 = vpop.f32.mrb[0].mxu0
        %924 = vmatprep.mubr.f32.mxu0 0.0
        %925 = vmatmul.mubr.f32.gmra.mrb[0].mxu0 %v744
        %v926 = vpop.f32.mrb[0].mxu0
        %v927 = vadd.f32 %v663, %v926
        %v928 = vpop.f32.mrb[0].mxu0
        %929 = vmatprep.mubr.f32.mxu0 0.0
        %930 = vmatmul.mubr.f32.gmra.mrb[0].mxu0 %v746
        %v931 = vpop.f32.mrb[0].mxu0
        %v932 = vadd.f32 %v668, %v931
        %v933 = vpop.f32.mrb[0].mxu0
        %934 = vmatprep.mubr.f32.mxu0 0.0
        %935 = vmatmul.mubr.f32.gmra.mrb[0].mxu0 %v748
        %v936 = vpop.f32.mrb[0].mxu0
        %v937 = vadd.f32 %v673, %v936
        %v938 = vpop.f32.mrb[0].mxu0
        %939 = vmatprep.mubr.f32.mxu0 0.0
        %940 = vmatmul.mubr.f32.gmra.mrb[0].mxu0 %v750
        %v941 = vpop.f32.mrb[0].mxu0
        %v942 = vadd.f32 %v678, %v941
        %v943 = vpop.f32.mrb[0].mxu0
        %944 = vmatprep.mubr.f32.mxu0 0.0
        %945 = vmatmul.mubr.f32.gmra.mrb[0].mxu0 %v752
        %v946 = vpop.f32.mrb[0].mxu0
        %v947 = vadd.f32 %v683, %v946
        %v948 = vpop.f32.mrb[0].mxu0
        %949 = vmatprep.mubr.f32.mxu0 0.0
        %950 = vmatmul.mubr.f32.gmra.mrb[0].mxu0 %v754
        %v951 = vpop.f32.mrb[0].mxu0
        %v952 = vadd.f32 %v688, %v951
        %v953 = vpop.f32.mrb[0].mxu0
        %954 = vmatprep.mubr.f32.mxu0 0.0
        %955 = vmatmul.mubr.f32.gmra.mrb[0].mxu0 %v756
        %v956 = vpop.f32.mrb[0].mxu0
        %v957 = vadd.f32 %v693, %v956
        %v958 = vpop.f32.mrb[0].mxu0
        %959 = vmatprep.mubr.f32.mxu0 0.0
        %960 = vmatmul.mubr.f32.gmra.mrb[0].mxu0 %v758
        %v961 = vpop.f32.mrb[0].mxu0
        %v962 = vadd.f32 %v698, %v961
        %v963 = vpop.f32.mrb[0].mxu0
        %964 = vmatprep.mubr.f32.mxu0 0.0
        %965 = vmatmul.mubr.f32.gmra.mrb[0].mxu0 %v760
        %v966 = vpop.f32.mrb[0].mxu0
        %v967 = vadd.f32 %v703, %v966
        %v968 = vpop.f32.mrb[0].mxu0
        %969 = vdwg.mxu0
        %vm970 = vcmask 1045504
        %v971 = vrot.slane %v276, 2
        %v972 = vrot.slane %v277, 2
        %v973 = vsel %vm970, %v971, %v972
        %v974 = vrot.slane %v278, 2
        %v975 = vsel %vm970, %v972, %v974
        %v976 = vrot.slane %v279, 2
        %v977 = vrot.slane %v280, 2
        %v978 = vsel %vm970, %v976, %v977
        %v979 = vrot.slane %v281, 2
        %v980 = vsel %vm970, %v977, %v979
        %v981 = vrot.slane %v282, 2
        %v982 = vrot.slane %v283, 2
        %v983 = vsel %vm970, %v981, %v982
        %v984 = vrot.slane %v284, 2
        %v985 = vsel %vm970, %v982, %v984
        %v986 = vrot.slane %v285, 2
        %v987 = vrot.slane %v286, 2
        %v988 = vsel %vm970, %v986, %v987
        %v989 = vrot.slane %v287, 2
        %v990 = vsel %vm970, %v987, %v989
        %v991 = vrot.slane %v288, 2
        %v992 = vrot.slane %v289, 2
        %v993 = vsel %vm970, %v991, %v992
        %v994 = vrot.slane %v290, 2
        %v995 = vsel %vm970, %v992, %v994
        %v996 = vrot.slane %v291, 2
        %v997 = vrot.slane %v292, 2
        %v998 = vsel %vm970, %v996, %v997
        %v999 = vrot.slane %v293, 2
        %v1000 = vsel %vm970, %v997, %v999
        %v1001 = vrot.slane %v294, 2
        %v1002 = vrot.slane %v295, 2
        %v1003 = vsel %vm970, %v1001, %v1002
        %v1004 = vrot.slane %v296, 2
        %v1005 = vsel %vm970, %v1002, %v1004
        %v1006 = vrot.slane %v297, 2
        %v1007 = vrot.slane %v298, 2
        %v1008 = vsel %vm970, %v1006, %v1007
        %v1009 = vrot.slane %v299, 2
        %v1010 = vsel %vm970, %v1007, %v1009
        %v1011 = vrot.slane %v300, 2
        %v1012 = vrot.slane %v301, 2
        %v1013 = vsel %vm970, %v1011, %v1012
        %v1014 = vrot.slane %v302, 2
        %v1015 = vsel %vm970, %v1012, %v1014
        %v1016 = vrot.slane %v303, 2
        %v1017 = vrot.slane %v304, 2
        %v1018 = vsel %vm970, %v1016, %v1017
        %v1019 = vrot.slane %v305, 2
        %v1020 = vsel %vm970, %v1017, %v1019
        %v1021 = vrot.slane %v306, 2
        %v1022 = vrot.slane %v307, 2
        %v1023 = vsel %vm970, %v1021, %v1022
        %v1024 = vrot.slane %v308, 2
        %v1025 = vsel %vm970, %v1022, %v1024
        %v1026 = vrot.slane %v309, 2
        %v1027 = vrot.slane %v310, 2
        %v1028 = vsel %vm970, %v1026, %v1027
        %v1029 = vrot.slane %v311, 2
        %v1030 = vsel %vm970, %v1027, %v1029
        %v1031 = vrot.slane %v312, 2
        %v1032 = vrot.slane %v313, 2
        %v1033 = vsel %vm970, %v1031, %v1032
        %v1034 = vrot.slane %v314, 2
        %v1035 = vsel %vm970, %v1032, %v1034
        %v1036 = vrot.slane %v315, 2
        %v1037 = vrot.slane %v316, 2
        %v1038 = vsel %vm970, %v1036, %v1037
        %v1039 = vrot.slane %v317, 2
        %v1040 = vsel %vm970, %v1037, %v1039
        %s1041 = scalar_lea.vmem %s2, 8
        %v1042 = vld [vmem:[%s1041] sm:$0xf]
        %v1043 = vsel %vm440, %v973, 0
        %v1045 = vsel %vm440, %v975, 0
        %v1047 = vsel %vm440, %v978, 0
        %v1049 = vsel %vm440, %v980, 0
        %v1051 = vsel %vm440, %v983, 0
        %v1053 = vsel %vm440, %v985, 0
        %v1055 = vsel %vm440, %v988, 0
        %v1057 = vsel %vm440, %v990, 0
        %v1059 = vsel %vm440, %v993, 0
        %v1061 = vsel %vm440, %v995, 0
        %v1063 = vsel %vm440, %v998, 0
        %v1065 = vsel %vm440, %v1000, 0
        %v1067 = vsel %vm440, %v1003, 0
        %v1069 = vsel %vm440, %v1005, 0
        %v1071 = vsel %vm440, %v1008, 0
        %v1073 = vsel %vm440, %v1010, 0
        %v1075 = vsel %vm440, %v1013, 0
        %v1077 = vsel %vm440, %v1015, 0
        %v1079 = vsel %vm440, %v1018, 0
        %v1081 = vsel %vm440, %v1020, 0
        %v1083 = vsel %vm440, %v1023, 0
        %v1085 = vsel %vm440, %v1025, 0
        %v1087 = vsel %vm440, %v1028, 0
        %v1089 = vsel %vm440, %v1030, 0
        %v1091 = vsel %vm440, %v1033, 0
        %v1093 = vsel %vm440, %v1035, 0
        %v1095 = vsel %vm440, %v1038, 0
        %v1097 = vsel %vm440, %v1040, 0
        %v1100 = vsel %vm497, %v1042, 0
        %1102 = vmatprep.subr.mxu0 0.0
        %1103 = vmatpush1.msra.mxu0 %v1100
        %1104 = vmatprep.subr.mxu0 0.0
        %1105 = vmatpush1.msra.mxu0 0.0
        %1106 = vmatprep.subr.mxu0 0.0
        %1107 = vmatpush1.msra.mxu0 0.0
        %1108 = vmatprep.subr.mxu0 0.0
        %1109 = vmatpush1.msra.mxu0 0.0
        %1110 = vmatprep.subr.mxu0 0.0
        %1111 = vmatpush1.msra.mxu0 0.0
        %1112 = vmatprep.subr.mxu0 0.0
        %1113 = vmatpush1.msra.mxu0 0.0
        %1114 = vmatprep.subr.mxu0 0.0
        %1115 = vmatpush1.msra.mxu0 0.0
        %1116 = vmatprep.subr.mxu0 0.0
        %1117 = vmatpush1.msra.mxu0 0.0
        %1118 = vmatprep.subr.mxu0 0.0
        %1119 = vmatpush1.msra.mxu0 0.0
        %1120 = vmatprep.subr.mxu0 0.0
        %1121 = vmatpush1.msra.mxu0 0.0
        %1122 = vmatprep.subr.mxu0 0.0
        %1123 = vmatpush1.msra.mxu0 0.0
        %1124 = vmatprep.subr.mxu0 0.0
        %1125 = vmatpush1.msra.mxu0 0.0
        %1126 = vmatprep.subr.mxu0 0.0
        %1127 = vmatpush1.msra.mxu0 0.0
        %1128 = vmatprep.subr.mxu0 0.0
        %1129 = vmatpush1.msra.mxu0 0.0
        %1130 = vmatprep.subr.mxu0 0.0
        %1131 = vmatpush1.msra.mxu0 0.0
        %1132 = vmatprep.subr.mxu0 0.0
        %1133 = vmatpush1.msra.mxu0 0.0
        %1134 = vmatprep.subr.mxu0 0.0
        %1135 = vmatpush1.msra.mxu0 0.0
        %1136 = vmatprep.subr.mxu0 0.0
        %1137 = vmatpush1.msra.mxu0 0.0
        %1138 = vmatprep.subr.mxu0 0.0
        %1139 = vmatpush1.msra.mxu0 0.0
        %1140 = vmatprep.subr.mxu0 0.0
        %1141 = vmatpush1.msra.mxu0 0.0
        %1142 = vmatprep.subr.mxu0 0.0
        %1143 = vmatpush1.msra.mxu0 0.0
        %1144 = vmatprep.subr.mxu0 0.0
        %1145 = vmatpush1.msra.mxu0 0.0
        %1146 = vmatprep.subr.mxu0 0.0
        %1147 = vmatpush1.msra.mxu0 0.0
        %1148 = vmatprep.subr.mxu0 0.0
        %1149 = vmatpush1.msra.mxu0 0.0
        %1150 = vmatprep.subr.mxu0 0.0
        %1151 = vmatpush1.msra.mxu0 0.0
        %1152 = vmatprep.subr.mxu0 0.0
        %1153 = vmatpush1.msra.mxu0 0.0
        %1154 = vmatprep.subr.mxu0 0.0
        %1155 = vmatpush1.msra.mxu0 0.0
        %1156 = vmatprep.subr.mxu0 0.0
        %1157 = vmatpush1.msra.mxu0 0.0
        %1158 = vmatprep.subr.mxu0 0.0
        %1159 = vmatpush1.msra.mxu0 0.0
        %1160 = vmatprep.subr.mxu0 0.0
        %1161 = vmatpush1.msra.mxu0 0.0
        %1162 = vmatprep.subr.mxu0 0.0
        %1163 = vmatpush1.msra.mxu0 0.0
        %1164 = vmatprep.subr.mxu0 0.0
        %1165 = vmatpush1.msra.mxu0 0.0
        %1166 = vmatprep.mubr.f32.mxu0 0.0
        %1167 = vmatmul.mubr.f32.gmra.mrb[0].mxu0 %v1043
        %v1168 = vpop.f32.mrb[0].mxu0
        %v1169 = vadd.f32 0.0, %v1168
        %v1170 = vpop.f32.mrb[0].mxu0
        %1171 = vmatprep.mubr.f32.mxu0 0.0
        %1172 = vmatmul.mubr.f32.gmra.mrb[0].mxu0 %v1045
        %v1173 = vpop.f32.mrb[0].mxu0
        %v1174 = vadd.f32 0.0, %v1173
        %v1175 = vpop.f32.mrb[0].mxu0
        %1176 = vmatprep.mubr.f32.mxu0 0.0
        %1177 = vmatmul.mubr.f32.gmra.mrb[0].mxu0 %v1047
        %v1178 = vpop.f32.mrb[0].mxu0
        %v1179 = vadd.f32 0.0, %v1178
        %v1180 = vpop.f32.mrb[0].mxu0
        %1181 = vmatprep.mubr.f32.mxu0 0.0
        %1182 = vmatmul.mubr.f32.gmra.mrb[0].mxu0 %v1049
        %v1183 = vpop.f32.mrb[0].mxu0
        %v1184 = vadd.f32 0.0, %v1183
        %v1185 = vpop.f32.mrb[0].mxu0
        %1186 = vmatprep.mubr.f32.mxu0 0.0
        %1187 = vmatmul.mubr.f32.gmra.mrb[0].mxu0 %v1051
        %v1188 = vpop.f32.mrb[0].mxu0
        %v1189 = vadd.f32 0.0, %v1188
        %v1190 = vpop.f32.mrb[0].mxu0
        %1191 = vmatprep.mubr.f32.mxu0 0.0
        %1192 = vmatmul.mubr.f32.gmra.mrb[0].mxu0 %v1053
        %v1193 = vpop.f32.mrb[0].mxu0
        %v1194 = vadd.f32 0.0, %v1193
        %v1195 = vpop.f32.mrb[0].mxu0
        %1196 = vmatprep.mubr.f32.mxu0 0.0
        %1197 = vmatmul.mubr.f32.gmra.mrb[0].mxu0 %v1055
        %v1198 = vpop.f32.mrb[0].mxu0
        %v1199 = vadd.f32 0.0, %v1198
        %v1200 = vpop.f32.mrb[0].mxu0
        %1201 = vmatprep.mubr.f32.mxu0 0.0
        %1202 = vmatmul.mubr.f32.gmra.mrb[0].mxu0 %v1057
        %v1203 = vpop.f32.mrb[0].mxu0
        %v1204 = vadd.f32 0.0, %v1203
        %v1205 = vpop.f32.mrb[0].mxu0
        %1206 = vmatprep.mubr.f32.mxu0 0.0
        %1207 = vmatmul.mubr.f32.gmra.mrb[0].mxu0 %v1059
        %v1208 = vpop.f32.mrb[0].mxu0
        %v1209 = vadd.f32 0.0, %v1208
        %v1210 = vpop.f32.mrb[0].mxu0
        %1211 = vmatprep.mubr.f32.mxu0 0.0
        %1212 = vmatmul.mubr.f32.gmra.mrb[0].mxu0 %v1061
        %v1213 = vpop.f32.mrb[0].mxu0
        %v1214 = vadd.f32 0.0, %v1213
        %v1215 = vpop.f32.mrb[0].mxu0
        %1216 = vmatprep.mubr.f32.mxu0 0.0
        %1217 = vmatmul.mubr.f32.gmra.mrb[0].mxu0 %v1063
        %v1218 = vpop.f32.mrb[0].mxu0
        %v1219 = vadd.f32 0.0, %v1218
        %v1220 = vpop.f32.mrb[0].mxu0
        %1221 = vmatprep.mubr.f32.mxu0 0.0
        %1222 = vmatmul.mubr.f32.gmra.mrb[0].mxu0 %v1065
        %v1223 = vpop.f32.mrb[0].mxu0
        %v1224 = vadd.f32 0.0, %v1223
        %v1225 = vpop.f32.mrb[0].mxu0
        %1226 = vmatprep.mubr.f32.mxu0 0.0
        %1227 = vmatmul.mubr.f32.gmra.mrb[0].mxu0 %v1067
        %v1228 = vpop.f32.mrb[0].mxu0
        %v1229 = vadd.f32 0.0, %v1228
        %v1230 = vpop.f32.mrb[0].mxu0
        %1231 = vmatprep.mubr.f32.mxu0 0.0
        %1232 = vmatmul.mubr.f32.gmra.mrb[0].mxu0 %v1069
        %v1233 = vpop.f32.mrb[0].mxu0
        %v1234 = vadd.f32 0.0, %v1233
        %v1235 = vpop.f32.mrb[0].mxu0
        %1236 = vmatprep.mubr.f32.mxu0 0.0
        %1237 = vmatmul.mubr.f32.gmra.mrb[0].mxu0 %v1071
        %v1238 = vpop.f32.mrb[0].mxu0
        %v1239 = vadd.f32 0.0, %v1238
        %v1240 = vpop.f32.mrb[0].mxu0
        %1241 = vmatprep.mubr.f32.mxu0 0.0
        %1242 = vmatmul.mubr.f32.gmra.mrb[0].mxu0 %v1073
        %v1243 = vpop.f32.mrb[0].mxu0
        %v1244 = vadd.f32 0.0, %v1243
        %v1245 = vpop.f32.mrb[0].mxu0
        %1246 = vmatprep.mubr.f32.mxu0 0.0
        %1247 = vmatmul.mubr.f32.gmra.mrb[0].mxu0 %v1075
        %v1248 = vpop.f32.mrb[0].mxu0
        %v1249 = vadd.f32 0.0, %v1248
        %v1250 = vpop.f32.mrb[0].mxu0
        %1251 = vmatprep.mubr.f32.mxu0 0.0
        %1252 = vmatmul.mubr.f32.gmra.mrb[0].mxu0 %v1077
        %v1253 = vpop.f32.mrb[0].mxu0
        %v1254 = vadd.f32 0.0, %v1253
        %v1255 = vpop.f32.mrb[0].mxu0
        %1256 = vmatprep.mubr.f32.mxu0 0.0
        %1257 = vmatmul.mubr.f32.gmra.mrb[0].mxu0 %v1079
        %v1258 = vpop.f32.mrb[0].mxu0
        %v1259 = vadd.f32 0.0, %v1258
        %v1260 = vpop.f32.mrb[0].mxu0
        %1261 = vmatprep.mubr.f32.mxu0 0.0
        %1262 = vmatmul.mubr.f32.gmra.mrb[0].mxu0 %v1081
        %v1263 = vpop.f32.mrb[0].mxu0
        %v1264 = vadd.f32 0.0, %v1263
        %v1265 = vpop.f32.mrb[0].mxu0
        %1266 = vmatprep.mubr.f32.mxu0 0.0
        %1267 = vmatmul.mubr.f32.gmra.mrb[0].mxu0 %v1083
        %v1268 = vpop.f32.mrb[0].mxu0
        %v1269 = vadd.f32 0.0, %v1268
        %v1270 = vpop.f32.mrb[0].mxu0
        %1271 = vmatprep.mubr.f32.mxu0 0.0
        %1272 = vmatmul.mubr.f32.gmra.mrb[0].mxu0 %v1085
        %v1273 = vpop.f32.mrb[0].mxu0
        %v1274 = vadd.f32 0.0, %v1273
        %v1275 = vpop.f32.mrb[0].mxu0
        %1276 = vmatprep.mubr.f32.mxu0 0.0
        %1277 = vmatmul.mubr.f32.gmra.mrb[0].mxu0 %v1087
        %v1278 = vpop.f32.mrb[0].mxu0
        %v1279 = vadd.f32 0.0, %v1278
        %v1280 = vpop.f32.mrb[0].mxu0
        %1281 = vmatprep.mubr.f32.mxu0 0.0
        %1282 = vmatmul.mubr.f32.gmra.mrb[0].mxu0 %v1089
        %v1283 = vpop.f32.mrb[0].mxu0
        %v1284 = vadd.f32 0.0, %v1283
        %v1285 = vpop.f32.mrb[0].mxu0
        %1286 = vmatprep.mubr.f32.mxu0 0.0
        %1287 = vmatmul.mubr.f32.gmra.mrb[0].mxu0 %v1091
        %v1288 = vpop.f32.mrb[0].mxu0
        %v1289 = vadd.f32 0.0, %v1288
        %v1290 = vpop.f32.mrb[0].mxu0
        %1291 = vmatprep.mubr.f32.mxu0 0.0
        %1292 = vmatmul.mubr.f32.gmra.mrb[0].mxu0 %v1093
        %v1293 = vpop.f32.mrb[0].mxu0
        %v1294 = vadd.f32 0.0, %v1293
        %v1295 = vpop.f32.mrb[0].mxu0
        %1296 = vmatprep.mubr.f32.mxu0 0.0
        %1297 = vmatmul.mubr.f32.gmra.mrb[0].mxu0 %v1095
        %v1298 = vpop.f32.mrb[0].mxu0
        %v1299 = vadd.f32 0.0, %v1298
        %v1300 = vpop.f32.mrb[0].mxu0
        %1301 = vmatprep.mubr.f32.mxu0 0.0
        %1302 = vmatmul.mubr.f32.gmra.mrb[0].mxu0 %v1097
        %v1303 = vpop.f32.mrb[0].mxu0
        %v1304 = vadd.f32 0.0, %v1303
        %v1305 = vpop.f32.mrb[0].mxu0
        %1306 = vdwg.mxu0
        %v1307 = vadd.f32 %v832, %v1169
        %v1308 = vadd.f32 %v837, %v1174
        %v1309 = vadd.f32 %v842, %v1179
        %v1310 = vadd.f32 %v847, %v1184
        %v1311 = vadd.f32 %v852, %v1189
        %v1312 = vadd.f32 %v857, %v1194
        %v1313 = vadd.f32 %v862, %v1199
        %v1314 = vadd.f32 %v867, %v1204
        %v1315 = vadd.f32 %v872, %v1209
        %v1316 = vadd.f32 %v877, %v1214
        %v1317 = vadd.f32 %v882, %v1219
        %v1318 = vadd.f32 %v887, %v1224
        %v1319 = vadd.f32 %v892, %v1229
        %v1320 = vadd.f32 %v897, %v1234
        %v1321 = vadd.f32 %v902, %v1239
        %v1322 = vadd.f32 %v907, %v1244
        %v1323 = vadd.f32 %v912, %v1249
        %v1324 = vadd.f32 %v917, %v1254
        %v1325 = vadd.f32 %v922, %v1259
        %v1326 = vadd.f32 %v927, %v1264
        %v1327 = vadd.f32 %v932, %v1269
        %v1328 = vadd.f32 %v937, %v1274
        %v1329 = vadd.f32 %v942, %v1279
        %v1330 = vadd.f32 %v947, %v1284
        %v1331 = vadd.f32 %v952, %v1289
        %v1332 = vadd.f32 %v957, %v1294
        %v1333 = vadd.f32 %v962, %v1299
        %v1334 = vadd.f32 %v967, %v1304
        %s1335 = scalar_lea.vmem %s2, 12
        %v1336 = vld [vmem:[%s1335] sm:$0xf]
        %v1338 = vsel %vm440, %v318, 0
        %v1341 = vsel %vm440, %v319, 0
        %v1344 = vsel %vm497, %v1336, 0
        %1346 = vmatprep.subr.mxu0 0.0
        %1347 = vmatpush1.msra.mxu0 %v1344
        %1348 = vmatprep.subr.mxu0 0.0
        %1349 = vmatpush1.msra.mxu0 0.0
        %1350 = vmatprep.subr.mxu0 0.0
        %1351 = vmatpush1.msra.mxu0 0.0
        %1352 = vmatprep.subr.mxu0 0.0
        %1353 = vmatpush1.msra.mxu0 0.0
        %1354 = vmatprep.subr.mxu0 0.0
        %1355 = vmatpush1.msra.mxu0 0.0
        %1356 = vmatprep.subr.mxu0 0.0
        %1357 = vmatpush1.msra.mxu0 0.0
        %1358 = vmatprep.subr.mxu0 0.0
        %1359 = vmatpush1.msra.mxu0 0.0
        %1360 = vmatprep.subr.mxu0 0.0
        %1361 = vmatpush1.msra.mxu0 0.0
        %1362 = vmatprep.subr.mxu0 0.0
        %1363 = vmatpush1.msra.mxu0 0.0
        %1364 = vmatprep.subr.mxu0 0.0
        %1365 = vmatpush1.msra.mxu0 0.0
        %1366 = vmatprep.subr.mxu0 0.0
        %1367 = vmatpush1.msra.mxu0 0.0
        %1368 = vmatprep.subr.mxu0 0.0
        %1369 = vmatpush1.msra.mxu0 0.0
        %1370 = vmatprep.subr.mxu0 0.0
        %1371 = vmatpush1.msra.mxu0 0.0
        %1372 = vmatprep.subr.mxu0 0.0
        %1373 = vmatpush1.msra.mxu0 0.0
        %1374 = vmatprep.subr.mxu0 0.0
        %1375 = vmatpush1.msra.mxu0 0.0
        %1376 = vmatprep.subr.mxu0 0.0
        %1377 = vmatpush1.msra.mxu0 0.0
        %1378 = vmatprep.subr.mxu0 0.0
        %1379 = vmatpush1.msra.mxu0 0.0
        %1380 = vmatprep.subr.mxu0 0.0
        %1381 = vmatpush1.msra.mxu0 0.0
        %1382 = vmatprep.subr.mxu0 0.0
        %1383 = vmatpush1.msra.mxu0 0.0
        %1384 = vmatprep.subr.mxu0 0.0
        %1385 = vmatpush1.msra.mxu0 0.0
        %1386 = vmatprep.subr.mxu0 0.0
        %1387 = vmatpush1.msra.mxu0 0.0
        %1388 = vmatprep.subr.mxu0 0.0
        %1389 = vmatpush1.msra.mxu0 0.0
        %1390 = vmatprep.subr.mxu0 0.0
        %1391 = vmatpush1.msra.mxu0 0.0
        %1392 = vmatprep.subr.mxu0 0.0
        %1393 = vmatpush1.msra.mxu0 0.0
        %1394 = vmatprep.subr.mxu0 0.0
        %1395 = vmatpush1.msra.mxu0 0.0
        %1396 = vmatprep.subr.mxu0 0.0
        %1397 = vmatpush1.msra.mxu0 0.0
        %1398 = vmatprep.subr.mxu0 0.0
        %1399 = vmatpush1.msra.mxu0 0.0
        %1400 = vmatprep.subr.mxu0 0.0
        %1401 = vmatpush1.msra.mxu0 0.0
        %1402 = vmatprep.subr.mxu0 0.0
        %1403 = vmatpush1.msra.mxu0 0.0
        %1404 = vmatprep.subr.mxu0 0.0
        %1405 = vmatpush1.msra.mxu0 0.0
        %1406 = vmatprep.subr.mxu0 0.0
        %1407 = vmatpush1.msra.mxu0 0.0
        %1408 = vmatprep.subr.mxu0 0.0
        %1409 = vmatpush1.msra.mxu0 0.0
        %1410 = vmatprep.mubr.f32.mxu0 0.0
        %1411 = vmatmul.mubr.f32.gmra.mrb[0].mxu0 %v710
        %v1412 = vpop.f32.mrb[0].mxu0
        %v1413 = vadd.f32 0.0, %v1412
        %v1414 = vpop.f32.mrb[0].mxu0
        %1415 = vmatprep.mubr.f32.mxu0 0.0
        %1416 = vmatmul.mubr.f32.gmra.mrb[0].mxu0 %v712
        %v1417 = vpop.f32.mrb[0].mxu0
        %v1418 = vadd.f32 0.0, %v1417
        %v1419 = vpop.f32.mrb[0].mxu0
        %1420 = vmatprep.mubr.f32.mxu0 0.0
        %1421 = vmatmul.mubr.f32.gmra.mrb[0].mxu0 %v714
        %v1422 = vpop.f32.mrb[0].mxu0
        %v1423 = vadd.f32 0.0, %v1422
        %v1424 = vpop.f32.mrb[0].mxu0
        %1425 = vmatprep.mubr.f32.mxu0 0.0
        %1426 = vmatmul.mubr.f32.gmra.mrb[0].mxu0 %v716
        %v1427 = vpop.f32.mrb[0].mxu0
        %v1428 = vadd.f32 0.0, %v1427
        %v1429 = vpop.f32.mrb[0].mxu0
        %1430 = vmatprep.mubr.f32.mxu0 0.0
        %1431 = vmatmul.mubr.f32.gmra.mrb[0].mxu0 %v718
        %v1432 = vpop.f32.mrb[0].mxu0
        %v1433 = vadd.f32 0.0, %v1432
        %v1434 = vpop.f32.mrb[0].mxu0
        %1435 = vmatprep.mubr.f32.mxu0 0.0
        %1436 = vmatmul.mubr.f32.gmra.mrb[0].mxu0 %v720
        %v1437 = vpop.f32.mrb[0].mxu0
        %v1438 = vadd.f32 0.0, %v1437
        %v1439 = vpop.f32.mrb[0].mxu0
        %1440 = vmatprep.mubr.f32.mxu0 0.0
        %1441 = vmatmul.mubr.f32.gmra.mrb[0].mxu0 %v722
        %v1442 = vpop.f32.mrb[0].mxu0
        %v1443 = vadd.f32 0.0, %v1442
        %v1444 = vpop.f32.mrb[0].mxu0
        %1445 = vmatprep.mubr.f32.mxu0 0.0
        %1446 = vmatmul.mubr.f32.gmra.mrb[0].mxu0 %v724
        %v1447 = vpop.f32.mrb[0].mxu0
        %v1448 = vadd.f32 0.0, %v1447
        %v1449 = vpop.f32.mrb[0].mxu0
        %1450 = vmatprep.mubr.f32.mxu0 0.0
        %1451 = vmatmul.mubr.f32.gmra.mrb[0].mxu0 %v726
        %v1452 = vpop.f32.mrb[0].mxu0
        %v1453 = vadd.f32 0.0, %v1452
        %v1454 = vpop.f32.mrb[0].mxu0
        %1455 = vmatprep.mubr.f32.mxu0 0.0
        %1456 = vmatmul.mubr.f32.gmra.mrb[0].mxu0 %v728
        %v1457 = vpop.f32.mrb[0].mxu0
        %v1458 = vadd.f32 0.0, %v1457
        %v1459 = vpop.f32.mrb[0].mxu0
        %1460 = vmatprep.mubr.f32.mxu0 0.0
        %1461 = vmatmul.mubr.f32.gmra.mrb[0].mxu0 %v730
        %v1462 = vpop.f32.mrb[0].mxu0
        %v1463 = vadd.f32 0.0, %v1462
        %v1464 = vpop.f32.mrb[0].mxu0
        %1465 = vmatprep.mubr.f32.mxu0 0.0
        %1466 = vmatmul.mubr.f32.gmra.mrb[0].mxu0 %v732
        %v1467 = vpop.f32.mrb[0].mxu0
        %v1468 = vadd.f32 0.0, %v1467
        %v1469 = vpop.f32.mrb[0].mxu0
        %1470 = vmatprep.mubr.f32.mxu0 0.0
        %1471 = vmatmul.mubr.f32.gmra.mrb[0].mxu0 %v734
        %v1472 = vpop.f32.mrb[0].mxu0
        %v1473 = vadd.f32 0.0, %v1472
        %v1474 = vpop.f32.mrb[0].mxu0
        %1475 = vmatprep.mubr.f32.mxu0 0.0
        %1476 = vmatmul.mubr.f32.gmra.mrb[0].mxu0 %v736
        %v1477 = vpop.f32.mrb[0].mxu0
        %v1478 = vadd.f32 0.0, %v1477
        %v1479 = vpop.f32.mrb[0].mxu0
        %1480 = vmatprep.mubr.f32.mxu0 0.0
        %1481 = vmatmul.mubr.f32.gmra.mrb[0].mxu0 %v738
        %v1482 = vpop.f32.mrb[0].mxu0
        %v1483 = vadd.f32 0.0, %v1482
        %v1484 = vpop.f32.mrb[0].mxu0
        %1485 = vmatprep.mubr.f32.mxu0 0.0
        %1486 = vmatmul.mubr.f32.gmra.mrb[0].mxu0 %v740
        %v1487 = vpop.f32.mrb[0].mxu0
        %v1488 = vadd.f32 0.0, %v1487
        %v1489 = vpop.f32.mrb[0].mxu0
        %1490 = vmatprep.mubr.f32.mxu0 0.0
        %1491 = vmatmul.mubr.f32.gmra.mrb[0].mxu0 %v742
        %v1492 = vpop.f32.mrb[0].mxu0
        %v1493 = vadd.f32 0.0, %v1492
        %v1494 = vpop.f32.mrb[0].mxu0
        %1495 = vmatprep.mubr.f32.mxu0 0.0
        %1496 = vmatmul.mubr.f32.gmra.mrb[0].mxu0 %v744
        %v1497 = vpop.f32.mrb[0].mxu0
        %v1498 = vadd.f32 0.0, %v1497
        %v1499 = vpop.f32.mrb[0].mxu0
        %1500 = vmatprep.mubr.f32.mxu0 0.0
        %1501 = vmatmul.mubr.f32.gmra.mrb[0].mxu0 %v746
        %v1502 = vpop.f32.mrb[0].mxu0
        %v1503 = vadd.f32 0.0, %v1502
        %v1504 = vpop.f32.mrb[0].mxu0
        %1505 = vmatprep.mubr.f32.mxu0 0.0
        %1506 = vmatmul.mubr.f32.gmra.mrb[0].mxu0 %v748
        %v1507 = vpop.f32.mrb[0].mxu0
        %v1508 = vadd.f32 0.0, %v1507
        %v1509 = vpop.f32.mrb[0].mxu0
        %1510 = vmatprep.mubr.f32.mxu0 0.0
        %1511 = vmatmul.mubr.f32.gmra.mrb[0].mxu0 %v750
        %v1512 = vpop.f32.mrb[0].mxu0
        %v1513 = vadd.f32 0.0, %v1512
        %v1514 = vpop.f32.mrb[0].mxu0
        %1515 = vmatprep.mubr.f32.mxu0 0.0
        %1516 = vmatmul.mubr.f32.gmra.mrb[0].mxu0 %v752
        %v1517 = vpop.f32.mrb[0].mxu0
        %v1518 = vadd.f32 0.0, %v1517
        %v1519 = vpop.f32.mrb[0].mxu0
        %1520 = vmatprep.mubr.f32.mxu0 0.0
        %1521 = vmatmul.mubr.f32.gmra.mrb[0].mxu0 %v754
        %v1522 = vpop.f32.mrb[0].mxu0
        %v1523 = vadd.f32 0.0, %v1522
        %v1524 = vpop.f32.mrb[0].mxu0
        %1525 = vmatprep.mubr.f32.mxu0 0.0
        %1526 = vmatmul.mubr.f32.gmra.mrb[0].mxu0 %v756
        %v1527 = vpop.f32.mrb[0].mxu0
        %v1528 = vadd.f32 0.0, %v1527
        %v1529 = vpop.f32.mrb[0].mxu0
        %1530 = vmatprep.mubr.f32.mxu0 0.0
        %1531 = vmatmul.mubr.f32.gmra.mrb[0].mxu0 %v758
        %v1532 = vpop.f32.mrb[0].mxu0
        %v1533 = vadd.f32 0.0, %v1532
        %v1534 = vpop.f32.mrb[0].mxu0
        %1535 = vmatprep.mubr.f32.mxu0 0.0
        %1536 = vmatmul.mubr.f32.gmra.mrb[0].mxu0 %v760
        %v1537 = vpop.f32.mrb[0].mxu0
        %v1538 = vadd.f32 0.0, %v1537
        %v1539 = vpop.f32.mrb[0].mxu0
        %1540 = vmatprep.mubr.f32.mxu0 0.0
        %1541 = vmatmul.mubr.f32.gmra.mrb[0].mxu0 %v1338
        %v1542 = vpop.f32.mrb[0].mxu0
        %v1543 = vadd.f32 0.0, %v1542
        %v1544 = vpop.f32.mrb[0].mxu0
        %1545 = vmatprep.mubr.f32.mxu0 0.0
        %1546 = vmatmul.mubr.f32.gmra.mrb[0].mxu0 %v1341
        %v1547 = vpop.f32.mrb[0].mxu0
        %v1548 = vadd.f32 0.0, %v1547
        %v1549 = vpop.f32.mrb[0].mxu0
        %1550 = vdwg.mxu0
        %v1551 = vadd.f32 %v1307, %v1413
        %v1552 = vadd.f32 %v1308, %v1418
        %v1553 = vadd.f32 %v1309, %v1423
        %v1554 = vadd.f32 %v1310, %v1428
        %v1555 = vadd.f32 %v1311, %v1433
        %v1556 = vadd.f32 %v1312, %v1438
        %v1557 = vadd.f32 %v1313, %v1443
        %v1558 = vadd.f32 %v1314, %v1448
        %v1559 = vadd.f32 %v1315, %v1453
        %v1560 = vadd.f32 %v1316, %v1458
        %v1561 = vadd.f32 %v1317, %v1463
        %v1562 = vadd.f32 %v1318, %v1468
        %v1563 = vadd.f32 %v1319, %v1473
        %v1564 = vadd.f32 %v1320, %v1478
        %v1565 = vadd.f32 %v1321, %v1483
        %v1566 = vadd.f32 %v1322, %v1488
        %v1567 = vadd.f32 %v1323, %v1493
        %v1568 = vadd.f32 %v1324, %v1498
        %v1569 = vadd.f32 %v1325, %v1503
        %v1570 = vadd.f32 %v1326, %v1508
        %v1571 = vadd.f32 %v1327, %v1513
        %v1572 = vadd.f32 %v1328, %v1518
        %v1573 = vadd.f32 %v1329, %v1523
        %v1574 = vadd.f32 %v1330, %v1528
        %v1575 = vadd.f32 %v1331, %v1533
        %v1576 = vadd.f32 %v1332, %v1538
        %v1577 = vadd.f32 %v1333, %v1543
        %v1578 = vadd.f32 %v1334, %v1548
        %v1580 = vrot.slane %v318, 1
        %v1581 = vrot.slane %v319, 1
        %v1582 = vsel %vm367, %v1580, %v1581
        %v1583 = vrot.slane %v320, 1
        %v1584 = vsel %vm367, %v1581, %v1583
        %s1585 = scalar_lea.vmem %s2, 16
        %v1586 = vld [vmem:[%s1585] sm:$0xf]
        %v1587 = vsel %vm440, %v1582, 0
        %v1589 = vsel %vm440, %v1584, 0
        %v1592 = vsel %vm497, %v1586, 0
        %1594 = vmatprep.subr.mxu0 0.0
        %1595 = vmatpush1.msra.mxu0 %v1592
        %1596 = vmatprep.subr.mxu0 0.0
        %1597 = vmatpush1.msra.mxu0 0.0
        %1598 = vmatprep.subr.mxu0 0.0
        %1599 = vmatpush1.msra.mxu0 0.0
        %1600 = vmatprep.subr.mxu0 0.0
        %1601 = vmatpush1.msra.mxu0 0.0
        %1602 = vmatprep.subr.mxu0 0.0
        %1603 = vmatpush1.msra.mxu0 0.0
        %1604 = vmatprep.subr.mxu0 0.0
        %1605 = vmatpush1.msra.mxu0 0.0
        %1606 = vmatprep.subr.mxu0 0.0
        %1607 = vmatpush1.msra.mxu0 0.0
        %1608 = vmatprep.subr.mxu0 0.0
        %1609 = vmatpush1.msra.mxu0 0.0
        %1610 = vmatprep.subr.mxu0 0.0
        %1611 = vmatpush1.msra.mxu0 0.0
        %1612 = vmatprep.subr.mxu0 0.0
        %1613 = vmatpush1.msra.mxu0 0.0
        %1614 = vmatprep.subr.mxu0 0.0
        %1615 = vmatpush1.msra.mxu0 0.0
        %1616 = vmatprep.subr.mxu0 0.0
        %1617 = vmatpush1.msra.mxu0 0.0
        %1618 = vmatprep.subr.mxu0 0.0
        %1619 = vmatpush1.msra.mxu0 0.0
        %1620 = vmatprep.subr.mxu0 0.0
        %1621 = vmatpush1.msra.mxu0 0.0
        %1622 = vmatprep.subr.mxu0 0.0
        %1623 = vmatpush1.msra.mxu0 0.0
        %1624 = vmatprep.subr.mxu0 0.0
        %1625 = vmatpush1.msra.mxu0 0.0
        %1626 = vmatprep.subr.mxu0 0.0
        %1627 = vmatpush1.msra.mxu0 0.0
        %1628 = vmatprep.subr.mxu0 0.0
        %1629 = vmatpush1.msra.mxu0 0.0
        %1630 = vmatprep.subr.mxu0 0.0
        %1631 = vmatpush1.msra.mxu0 0.0
        %1632 = vmatprep.subr.mxu0 0.0
        %1633 = vmatpush1.msra.mxu0 0.0
        %1634 = vmatprep.subr.mxu0 0.0
        %1635 = vmatpush1.msra.mxu0 0.0
        %1636 = vmatprep.subr.mxu0 0.0
        %1637 = vmatpush1.msra.mxu0 0.0
        %1638 = vmatprep.subr.mxu0 0.0
        %1639 = vmatpush1.msra.mxu0 0.0
        %1640 = vmatprep.subr.mxu0 0.0
        %1641 = vmatpush1.msra.mxu0 0.0
        %1642 = vmatprep.subr.mxu0 0.0
        %1643 = vmatpush1.msra.mxu0 0.0
        %1644 = vmatprep.subr.mxu0 0.0
        %1645 = vmatpush1.msra.mxu0 0.0
        %1646 = vmatprep.subr.mxu0 0.0
        %1647 = vmatpush1.msra.mxu0 0.0
        %1648 = vmatprep.subr.mxu0 0.0
        %1649 = vmatpush1.msra.mxu0 0.0
        %1650 = vmatprep.subr.mxu0 0.0
        %1651 = vmatpush1.msra.mxu0 0.0
        %1652 = vmatprep.subr.mxu0 0.0
        %1653 = vmatpush1.msra.mxu0 0.0
        %1654 = vmatprep.subr.mxu0 0.0
        %1655 = vmatpush1.msra.mxu0 0.0
        %1656 = vmatprep.subr.mxu0 0.0
        %1657 = vmatpush1.msra.mxu0 0.0
        %1658 = vmatprep.mubr.f32.mxu0 0.0
        %1659 = vmatmul.mubr.f32.gmra.mrb[0].mxu0 %v445
        %v1660 = vpop.f32.mrb[0].mxu0
        %v1661 = vadd.f32 0.0, %v1660
        %v1662 = vpop.f32.mrb[0].mxu0
        %1663 = vmatprep.mubr.f32.mxu0 0.0
        %1664 = vmatmul.mubr.f32.gmra.mrb[0].mxu0 %v447
        %v1665 = vpop.f32.mrb[0].mxu0
        %v1666 = vadd.f32 0.0, %v1665
        %v1667 = vpop.f32.mrb[0].mxu0
        %1668 = vmatprep.mubr.f32.mxu0 0.0
        %1669 = vmatmul.mubr.f32.gmra.mrb[0].mxu0 %v449
        %v1670 = vpop.f32.mrb[0].mxu0
        %v1671 = vadd.f32 0.0, %v1670
        %v1672 = vpop.f32.mrb[0].mxu0
        %1673 = vmatprep.mubr.f32.mxu0 0.0
        %1674 = vmatmul.mubr.f32.gmra.mrb[0].mxu0 %v451
        %v1675 = vpop.f32.mrb[0].mxu0
        %v1676 = vadd.f32 0.0, %v1675
        %v1677 = vpop.f32.mrb[0].mxu0
        %1678 = vmatprep.mubr.f32.mxu0 0.0
        %1679 = vmatmul.mubr.f32.gmra.mrb[0].mxu0 %v453
        %v1680 = vpop.f32.mrb[0].mxu0
        %v1681 = vadd.f32 0.0, %v1680
        %v1682 = vpop.f32.mrb[0].mxu0
        %1683 = vmatprep.mubr.f32.mxu0 0.0
        %1684 = vmatmul.mubr.f32.gmra.mrb[0].mxu0 %v455
        %v1685 = vpop.f32.mrb[0].mxu0
        %v1686 = vadd.f32 0.0, %v1685
        %v1687 = vpop.f32.mrb[0].mxu0
        %1688 = vmatprep.mubr.f32.mxu0 0.0
        %1689 = vmatmul.mubr.f32.gmra.mrb[0].mxu0 %v457
        %v1690 = vpop.f32.mrb[0].mxu0
        %v1691 = vadd.f32 0.0, %v1690
        %v1692 = vpop.f32.mrb[0].mxu0
        %1693 = vmatprep.mubr.f32.mxu0 0.0
        %1694 = vmatmul.mubr.f32.gmra.mrb[0].mxu0 %v459
        %v1695 = vpop.f32.mrb[0].mxu0
        %v1696 = vadd.f32 0.0, %v1695
        %v1697 = vpop.f32.mrb[0].mxu0
        %1698 = vmatprep.mubr.f32.mxu0 0.0
        %1699 = vmatmul.mubr.f32.gmra.mrb[0].mxu0 %v461
        %v1700 = vpop.f32.mrb[0].mxu0
        %v1701 = vadd.f32 0.0, %v1700
        %v1702 = vpop.f32.mrb[0].mxu0
        %1703 = vmatprep.mubr.f32.mxu0 0.0
        %1704 = vmatmul.mubr.f32.gmra.mrb[0].mxu0 %v463
        %v1705 = vpop.f32.mrb[0].mxu0
        %v1706 = vadd.f32 0.0, %v1705
        %v1707 = vpop.f32.mrb[0].mxu0
        %1708 = vmatprep.mubr.f32.mxu0 0.0
        %1709 = vmatmul.mubr.f32.gmra.mrb[0].mxu0 %v465
        %v1710 = vpop.f32.mrb[0].mxu0
        %v1711 = vadd.f32 0.0, %v1710
        %v1712 = vpop.f32.mrb[0].mxu0
        %1713 = vmatprep.mubr.f32.mxu0 0.0
        %1714 = vmatmul.mubr.f32.gmra.mrb[0].mxu0 %v467
        %v1715 = vpop.f32.mrb[0].mxu0
        %v1716 = vadd.f32 0.0, %v1715
        %v1717 = vpop.f32.mrb[0].mxu0
        %1718 = vmatprep.mubr.f32.mxu0 0.0
        %1719 = vmatmul.mubr.f32.gmra.mrb[0].mxu0 %v469
        %v1720 = vpop.f32.mrb[0].mxu0
        %v1721 = vadd.f32 0.0, %v1720
        %v1722 = vpop.f32.mrb[0].mxu0
        %1723 = vmatprep.mubr.f32.mxu0 0.0
        %1724 = vmatmul.mubr.f32.gmra.mrb[0].mxu0 %v471
        %v1725 = vpop.f32.mrb[0].mxu0
        %v1726 = vadd.f32 0.0, %v1725
        %v1727 = vpop.f32.mrb[0].mxu0
        %1728 = vmatprep.mubr.f32.mxu0 0.0
        %1729 = vmatmul.mubr.f32.gmra.mrb[0].mxu0 %v473
        %v1730 = vpop.f32.mrb[0].mxu0
        %v1731 = vadd.f32 0.0, %v1730
        %v1732 = vpop.f32.mrb[0].mxu0
        %1733 = vmatprep.mubr.f32.mxu0 0.0
        %1734 = vmatmul.mubr.f32.gmra.mrb[0].mxu0 %v475
        %v1735 = vpop.f32.mrb[0].mxu0
        %v1736 = vadd.f32 0.0, %v1735
        %v1737 = vpop.f32.mrb[0].mxu0
        %1738 = vmatprep.mubr.f32.mxu0 0.0
        %1739 = vmatmul.mubr.f32.gmra.mrb[0].mxu0 %v477
        %v1740 = vpop.f32.mrb[0].mxu0
        %v1741 = vadd.f32 0.0, %v1740
        %v1742 = vpop.f32.mrb[0].mxu0
        %1743 = vmatprep.mubr.f32.mxu0 0.0
        %1744 = vmatmul.mubr.f32.gmra.mrb[0].mxu0 %v479
        %v1745 = vpop.f32.mrb[0].mxu0
        %v1746 = vadd.f32 0.0, %v1745
        %v1747 = vpop.f32.mrb[0].mxu0
        %1748 = vmatprep.mubr.f32.mxu0 0.0
        %1749 = vmatmul.mubr.f32.gmra.mrb[0].mxu0 %v481
        %v1750 = vpop.f32.mrb[0].mxu0
        %v1751 = vadd.f32 0.0, %v1750
        %v1752 = vpop.f32.mrb[0].mxu0
        %1753 = vmatprep.mubr.f32.mxu0 0.0
        %1754 = vmatmul.mubr.f32.gmra.mrb[0].mxu0 %v483
        %v1755 = vpop.f32.mrb[0].mxu0
        %v1756 = vadd.f32 0.0, %v1755
        %v1757 = vpop.f32.mrb[0].mxu0
        %1758 = vmatprep.mubr.f32.mxu0 0.0
        %1759 = vmatmul.mubr.f32.gmra.mrb[0].mxu0 %v485
        %v1760 = vpop.f32.mrb[0].mxu0
        %v1761 = vadd.f32 0.0, %v1760
        %v1762 = vpop.f32.mrb[0].mxu0
        %1763 = vmatprep.mubr.f32.mxu0 0.0
        %1764 = vmatmul.mubr.f32.gmra.mrb[0].mxu0 %v487
        %v1765 = vpop.f32.mrb[0].mxu0
        %v1766 = vadd.f32 0.0, %v1765
        %v1767 = vpop.f32.mrb[0].mxu0
        %1768 = vmatprep.mubr.f32.mxu0 0.0
        %1769 = vmatmul.mubr.f32.gmra.mrb[0].mxu0 %v489
        %v1770 = vpop.f32.mrb[0].mxu0
        %v1771 = vadd.f32 0.0, %v1770
        %v1772 = vpop.f32.mrb[0].mxu0
        %1773 = vmatprep.mubr.f32.mxu0 0.0
        %1774 = vmatmul.mubr.f32.gmra.mrb[0].mxu0 %v491
        %v1775 = vpop.f32.mrb[0].mxu0
        %v1776 = vadd.f32 0.0, %v1775
        %v1777 = vpop.f32.mrb[0].mxu0
        %1778 = vmatprep.mubr.f32.mxu0 0.0
        %1779 = vmatmul.mubr.f32.gmra.mrb[0].mxu0 %v493
        %v1780 = vpop.f32.mrb[0].mxu0
        %v1781 = vadd.f32 0.0, %v1780
        %v1782 = vpop.f32.mrb[0].mxu0
        %1783 = vmatprep.mubr.f32.mxu0 0.0
        %1784 = vmatmul.mubr.f32.gmra.mrb[0].mxu0 %v495
        %v1785 = vpop.f32.mrb[0].mxu0
        %v1786 = vadd.f32 0.0, %v1785
        %v1787 = vpop.f32.mrb[0].mxu0
        %1788 = vmatprep.mubr.f32.mxu0 0.0
        %1789 = vmatmul.mubr.f32.gmra.mrb[0].mxu0 %v1587
        %v1790 = vpop.f32.mrb[0].mxu0
        %v1791 = vadd.f32 0.0, %v1790
        %v1792 = vpop.f32.mrb[0].mxu0
        %1793 = vmatprep.mubr.f32.mxu0 0.0
        %1794 = vmatmul.mubr.f32.gmra.mrb[0].mxu0 %v1589
        %v1795 = vpop.f32.mrb[0].mxu0
        %v1796 = vadd.f32 0.0, %v1795
        %v1797 = vpop.f32.mrb[0].mxu0
        %1798 = vdwg.mxu0
        %v1799 = vadd.f32 %v1551, %v1661
        %v1800 = vadd.f32 %v1552, %v1666
        %v1801 = vadd.f32 %v1553, %v1671
        %v1802 = vadd.f32 %v1554, %v1676
        %v1803 = vadd.f32 %v1555, %v1681
        %v1804 = vadd.f32 %v1556, %v1686
        %v1805 = vadd.f32 %v1557, %v1691
        %v1806 = vadd.f32 %v1558, %v1696
        %v1807 = vadd.f32 %v1559, %v1701
        %v1808 = vadd.f32 %v1560, %v1706
        %v1809 = vadd.f32 %v1561, %v1711
        %v1810 = vadd.f32 %v1562, %v1716
        %v1811 = vadd.f32 %v1563, %v1721
        %v1812 = vadd.f32 %v1564, %v1726
        %v1813 = vadd.f32 %v1565, %v1731
        %v1814 = vadd.f32 %v1566, %v1736
        %v1815 = vadd.f32 %v1567, %v1741
        %v1816 = vadd.f32 %v1568, %v1746
        %v1817 = vadd.f32 %v1569, %v1751
        %v1818 = vadd.f32 %v1570, %v1756
        %v1819 = vadd.f32 %v1571, %v1761
        %v1820 = vadd.f32 %v1572, %v1766
        %v1821 = vadd.f32 %v1573, %v1771
        %v1822 = vadd.f32 %v1574, %v1776
        %v1823 = vadd.f32 %v1575, %v1781
        %v1824 = vadd.f32 %v1576, %v1786
        %v1825 = vadd.f32 %v1577, %v1791
        %v1826 = vadd.f32 %v1578, %v1796
        %v1827 = vrot.slane %v318, 2
        %v1828 = vrot.slane %v319, 2
        %v1829 = vsel %vm970, %v1827, %v1828
        %v1830 = vrot.slane %v320, 2
        %v1831 = vsel %vm970, %v1828, %v1830
        %s1832 = scalar_lea.vmem %s2, 20
        %v1833 = vld [vmem:[%s1832] sm:$0xf]
        %v1834 = vsel %vm440, %v1829, 0
        %v1836 = vsel %vm440, %v1831, 0
        %v1839 = vsel %vm497, %v1833, 0
        %1841 = vmatprep.subr.mxu0 0.0
        %1842 = vmatpush1.msra.mxu0 %v1839
        %1843 = vmatprep.subr.mxu0 0.0
        %1844 = vmatpush1.msra.mxu0 0.0
        %1845 = vmatprep.subr.mxu0 0.0
        %1846 = vmatpush1.msra.mxu0 0.0
        %1847 = vmatprep.subr.mxu0 0.0
        %1848 = vmatpush1.msra.mxu0 0.0
        %1849 = vmatprep.subr.mxu0 0.0
        %1850 = vmatpush1.msra.mxu0 0.0
        %1851 = vmatprep.subr.mxu0 0.0
        %1852 = vmatpush1.msra.mxu0 0.0
        %1853 = vmatprep.subr.mxu0 0.0
        %1854 = vmatpush1.msra.mxu0 0.0
        %1855 = vmatprep.subr.mxu0 0.0
        %1856 = vmatpush1.msra.mxu0 0.0
        %1857 = vmatprep.subr.mxu0 0.0
        %1858 = vmatpush1.msra.mxu0 0.0
        %1859 = vmatprep.subr.mxu0 0.0
        %1860 = vmatpush1.msra.mxu0 0.0
        %1861 = vmatprep.subr.mxu0 0.0
        %1862 = vmatpush1.msra.mxu0 0.0
        %1863 = vmatprep.subr.mxu0 0.0
        %1864 = vmatpush1.msra.mxu0 0.0
        %1865 = vmatprep.subr.mxu0 0.0
        %1866 = vmatpush1.msra.mxu0 0.0
        %1867 = vmatprep.subr.mxu0 0.0
        %1868 = vmatpush1.msra.mxu0 0.0
        %1869 = vmatprep.subr.mxu0 0.0
        %1870 = vmatpush1.msra.mxu0 0.0
        %1871 = vmatprep.subr.mxu0 0.0
        %1872 = vmatpush1.msra.mxu0 0.0
        %1873 = vmatprep.subr.mxu0 0.0
        %1874 = vmatpush1.msra.mxu0 0.0
        %1875 = vmatprep.subr.mxu0 0.0
        %1876 = vmatpush1.msra.mxu0 0.0
        %1877 = vmatprep.subr.mxu0 0.0
        %1878 = vmatpush1.msra.mxu0 0.0
        %1879 = vmatprep.subr.mxu0 0.0
        %1880 = vmatpush1.msra.mxu0 0.0
        %1881 = vmatprep.subr.mxu0 0.0
        %1882 = vmatpush1.msra.mxu0 0.0
        %1883 = vmatprep.subr.mxu0 0.0
        %1884 = vmatpush1.msra.mxu0 0.0
        %1885 = vmatprep.subr.mxu0 0.0
        %1886 = vmatpush1.msra.mxu0 0.0
        %1887 = vmatprep.subr.mxu0 0.0
        %1888 = vmatpush1.msra.mxu0 0.0
        %1889 = vmatprep.subr.mxu0 0.0
        %1890 = vmatpush1.msra.mxu0 0.0
        %1891 = vmatprep.subr.mxu0 0.0
        %1892 = vmatpush1.msra.mxu0 0.0
        %1893 = vmatprep.subr.mxu0 0.0
        %1894 = vmatpush1.msra.mxu0 0.0
        %1895 = vmatprep.subr.mxu0 0.0
        %1896 = vmatpush1.msra.mxu0 0.0
        %1897 = vmatprep.subr.mxu0 0.0
        %1898 = vmatpush1.msra.mxu0 0.0
        %1899 = vmatprep.subr.mxu0 0.0
        %1900 = vmatpush1.msra.mxu0 0.0
        %1901 = vmatprep.subr.mxu0 0.0
        %1902 = vmatpush1.msra.mxu0 0.0
        %1903 = vmatprep.subr.mxu0 0.0
        %1904 = vmatpush1.msra.mxu0 0.0
        %1905 = vmatprep.mubr.f32.mxu0 0.0
        %1906 = vmatmul.mubr.f32.gmra.mrb[0].mxu0 %v1047
        %v1907 = vpop.f32.mrb[0].mxu0
        %v1908 = vadd.f32 0.0, %v1907
        %v1909 = vpop.f32.mrb[0].mxu0
        %1910 = vmatprep.mubr.f32.mxu0 0.0
        %1911 = vmatmul.mubr.f32.gmra.mrb[0].mxu0 %v1049
        %v1912 = vpop.f32.mrb[0].mxu0
        %v1913 = vadd.f32 0.0, %v1912
        %v1914 = vpop.f32.mrb[0].mxu0
        %1915 = vmatprep.mubr.f32.mxu0 0.0
        %1916 = vmatmul.mubr.f32.gmra.mrb[0].mxu0 %v1051
        %v1917 = vpop.f32.mrb[0].mxu0
        %v1918 = vadd.f32 0.0, %v1917
        %v1919 = vpop.f32.mrb[0].mxu0
        %1920 = vmatprep.mubr.f32.mxu0 0.0
        %1921 = vmatmul.mubr.f32.gmra.mrb[0].mxu0 %v1053
        %v1922 = vpop.f32.mrb[0].mxu0
        %v1923 = vadd.f32 0.0, %v1922
        %v1924 = vpop.f32.mrb[0].mxu0
        %1925 = vmatprep.mubr.f32.mxu0 0.0
        %1926 = vmatmul.mubr.f32.gmra.mrb[0].mxu0 %v1055
        %v1927 = vpop.f32.mrb[0].mxu0
        %v1928 = vadd.f32 0.0, %v1927
        %v1929 = vpop.f32.mrb[0].mxu0
        %1930 = vmatprep.mubr.f32.mxu0 0.0
        %1931 = vmatmul.mubr.f32.gmra.mrb[0].mxu0 %v1057
        %v1932 = vpop.f32.mrb[0].mxu0
        %v1933 = vadd.f32 0.0, %v1932
        %v1934 = vpop.f32.mrb[0].mxu0
        %1935 = vmatprep.mubr.f32.mxu0 0.0
        %1936 = vmatmul.mubr.f32.gmra.mrb[0].mxu0 %v1059
        %v1937 = vpop.f32.mrb[0].mxu0
        %v1938 = vadd.f32 0.0, %v1937
        %v1939 = vpop.f32.mrb[0].mxu0
        %1940 = vmatprep.mubr.f32.mxu0 0.0
        %1941 = vmatmul.mubr.f32.gmra.mrb[0].mxu0 %v1061
        %v1942 = vpop.f32.mrb[0].mxu0
        %v1943 = vadd.f32 0.0, %v1942
        %v1944 = vpop.f32.mrb[0].mxu0
        %1945 = vmatprep.mubr.f32.mxu0 0.0
        %1946 = vmatmul.mubr.f32.gmra.mrb[0].mxu0 %v1063
        %v1947 = vpop.f32.mrb[0].mxu0
        %v1948 = vadd.f32 0.0, %v1947
        %v1949 = vpop.f32.mrb[0].mxu0
        %1950 = vmatprep.mubr.f32.mxu0 0.0
        %1951 = vmatmul.mubr.f32.gmra.mrb[0].mxu0 %v1065
        %v1952 = vpop.f32.mrb[0].mxu0
        %v1953 = vadd.f32 0.0, %v1952
        %v1954 = vpop.f32.mrb[0].mxu0
        %1955 = vmatprep.mubr.f32.mxu0 0.0
        %1956 = vmatmul.mubr.f32.gmra.mrb[0].mxu0 %v1067
        %v1957 = vpop.f32.mrb[0].mxu0
        %v1958 = vadd.f32 0.0, %v1957
        %v1959 = vpop.f32.mrb[0].mxu0
        %1960 = vmatprep.mubr.f32.mxu0 0.0
        %1961 = vmatmul.mubr.f32.gmra.mrb[0].mxu0 %v1069
        %v1962 = vpop.f32.mrb[0].mxu0
        %v1963 = vadd.f32 0.0, %v1962
        %v1964 = vpop.f32.mrb[0].mxu0
        %1965 = vmatprep.mubr.f32.mxu0 0.0
        %1966 = vmatmul.mubr.f32.gmra.mrb[0].mxu0 %v1071
        %v1967 = vpop.f32.mrb[0].mxu0
        %v1968 = vadd.f32 0.0, %v1967
        %v1969 = vpop.f32.mrb[0].mxu0
        %1970 = vmatprep.mubr.f32.mxu0 0.0
        %1971 = vmatmul.mubr.f32.gmra.mrb[0].mxu0 %v1073
        %v1972 = vpop.f32.mrb[0].mxu0
        %v1973 = vadd.f32 0.0, %v1972
        %v1974 = vpop.f32.mrb[0].mxu0
        %1975 = vmatprep.mubr.f32.mxu0 0.0
        %1976 = vmatmul.mubr.f32.gmra.mrb[0].mxu0 %v1075
        %v1977 = vpop.f32.mrb[0].mxu0
        %v1978 = vadd.f32 0.0, %v1977
        %v1979 = vpop.f32.mrb[0].mxu0
        %1980 = vmatprep.mubr.f32.mxu0 0.0
        %1981 = vmatmul.mubr.f32.gmra.mrb[0].mxu0 %v1077
        %v1982 = vpop.f32.mrb[0].mxu0
        %v1983 = vadd.f32 0.0, %v1982
        %v1984 = vpop.f32.mrb[0].mxu0
        %1985 = vmatprep.mubr.f32.mxu0 0.0
        %1986 = vmatmul.mubr.f32.gmra.mrb[0].mxu0 %v1079
        %v1987 = vpop.f32.mrb[0].mxu0
        %v1988 = vadd.f32 0.0, %v1987
        %v1989 = vpop.f32.mrb[0].mxu0
        %1990 = vmatprep.mubr.f32.mxu0 0.0
        %1991 = vmatmul.mubr.f32.gmra.mrb[0].mxu0 %v1081
        %v1992 = vpop.f32.mrb[0].mxu0
        %v1993 = vadd.f32 0.0, %v1992
        %v1994 = vpop.f32.mrb[0].mxu0
        %1995 = vmatprep.mubr.f32.mxu0 0.0
        %1996 = vmatmul.mubr.f32.gmra.mrb[0].mxu0 %v1083
        %v1997 = vpop.f32.mrb[0].mxu0
        %v1998 = vadd.f32 0.0, %v1997
        %v1999 = vpop.f32.mrb[0].mxu0
        %2000 = vmatprep.mubr.f32.mxu0 0.0
        %2001 = vmatmul.mubr.f32.gmra.mrb[0].mxu0 %v1085
        %v2002 = vpop.f32.mrb[0].mxu0
        %v2003 = vadd.f32 0.0, %v2002
        %v2004 = vpop.f32.mrb[0].mxu0
        %2005 = vmatprep.mubr.f32.mxu0 0.0
        %2006 = vmatmul.mubr.f32.gmra.mrb[0].mxu0 %v1087
        %v2007 = vpop.f32.mrb[0].mxu0
        %v2008 = vadd.f32 0.0, %v2007
        %v2009 = vpop.f32.mrb[0].mxu0
        %2010 = vmatprep.mubr.f32.mxu0 0.0
        %2011 = vmatmul.mubr.f32.gmra.mrb[0].mxu0 %v1089
        %v2012 = vpop.f32.mrb[0].mxu0
        %v2013 = vadd.f32 0.0, %v2012
        %v2014 = vpop.f32.mrb[0].mxu0
        %2015 = vmatprep.mubr.f32.mxu0 0.0
        %2016 = vmatmul.mubr.f32.gmra.mrb[0].mxu0 %v1091
        %v2017 = vpop.f32.mrb[0].mxu0
        %v2018 = vadd.f32 0.0, %v2017
        %v2019 = vpop.f32.mrb[0].mxu0
        %2020 = vmatprep.mubr.f32.mxu0 0.0
        %2021 = vmatmul.mubr.f32.gmra.mrb[0].mxu0 %v1093
        %v2022 = vpop.f32.mrb[0].mxu0
        %v2023 = vadd.f32 0.0, %v2022
        %v2024 = vpop.f32.mrb[0].mxu0
        %2025 = vmatprep.mubr.f32.mxu0 0.0
        %2026 = vmatmul.mubr.f32.gmra.mrb[0].mxu0 %v1095
        %v2027 = vpop.f32.mrb[0].mxu0
        %v2028 = vadd.f32 0.0, %v2027
        %v2029 = vpop.f32.mrb[0].mxu0
        %2030 = vmatprep.mubr.f32.mxu0 0.0
        %2031 = vmatmul.mubr.f32.gmra.mrb[0].mxu0 %v1097
        %v2032 = vpop.f32.mrb[0].mxu0
        %v2033 = vadd.f32 0.0, %v2032
        %v2034 = vpop.f32.mrb[0].mxu0
        %2035 = vmatprep.mubr.f32.mxu0 0.0
        %2036 = vmatmul.mubr.f32.gmra.mrb[0].mxu0 %v1834
        %v2037 = vpop.f32.mrb[0].mxu0
        %v2038 = vadd.f32 0.0, %v2037
        %v2039 = vpop.f32.mrb[0].mxu0
        %2040 = vmatprep.mubr.f32.mxu0 0.0
        %2041 = vmatmul.mubr.f32.gmra.mrb[0].mxu0 %v1836
        %v2042 = vpop.f32.mrb[0].mxu0
        %v2043 = vadd.f32 0.0, %v2042
        %v2044 = vpop.f32.mrb[0].mxu0
        %2045 = vdwg.mxu0
        %v2046 = vadd.f32 %v1799, %v1908
        %v2047 = vadd.f32 %v1800, %v1913
        %v2048 = vadd.f32 %v1801, %v1918
        %v2049 = vadd.f32 %v1802, %v1923
        %v2050 = vadd.f32 %v1803, %v1928
        %v2051 = vadd.f32 %v1804, %v1933
        %v2052 = vadd.f32 %v1805, %v1938
        %v2053 = vadd.f32 %v1806, %v1943
        %v2054 = vadd.f32 %v1807, %v1948
        %v2055 = vadd.f32 %v1808, %v1953
        %v2056 = vadd.f32 %v1809, %v1958
        %v2057 = vadd.f32 %v1810, %v1963
        %v2058 = vadd.f32 %v1811, %v1968
        %v2059 = vadd.f32 %v1812, %v1973
        %v2060 = vadd.f32 %v1813, %v1978
        %v2061 = vadd.f32 %v1814, %v1983
        %v2062 = vadd.f32 %v1815, %v1988
        %v2063 = vadd.f32 %v1816, %v1993
        %v2064 = vadd.f32 %v1817, %v1998
        %v2065 = vadd.f32 %v1818, %v2003
        %v2066 = vadd.f32 %v1819, %v2008
        %v2067 = vadd.f32 %v1820, %v2013
        %v2068 = vadd.f32 %v1821, %v2018
        %v2069 = vadd.f32 %v1822, %v2023
        %v2070 = vadd.f32 %v1823, %v2028
        %v2071 = vadd.f32 %v1824, %v2033
        %v2072 = vadd.f32 %v1825, %v2038
        %v2073 = vadd.f32 %v1826, %v2043
        %s2074 = scalar_lea.vmem %s2, 24
        %v2075 = vld [vmem:[%s2074] sm:$0xf]
        %v2077 = vsel %vm440, %v321, 0
        %v2080 = vsel %vm440, %v322, 0
        %v2083 = vsel %vm497, %v2075, 0
        %2085 = vmatprep.subr.mxu0 0.0
        %2086 = vmatpush1.msra.mxu0 %v2083
        %2087 = vmatprep.subr.mxu0 0.0
        %2088 = vmatpush1.msra.mxu0 0.0
        %2089 = vmatprep.subr.mxu0 0.0
        %2090 = vmatpush1.msra.mxu0 0.0
        %2091 = vmatprep.subr.mxu0 0.0
        %2092 = vmatpush1.msra.mxu0 0.0
        %2093 = vmatprep.subr.mxu0 0.0
        %2094 = vmatpush1.msra.mxu0 0.0
        %2095 = vmatprep.subr.mxu0 0.0
        %2096 = vmatpush1.msra.mxu0 0.0
        %2097 = vmatprep.subr.mxu0 0.0
        %2098 = vmatpush1.msra.mxu0 0.0
        %2099 = vmatprep.subr.mxu0 0.0
        %2100 = vmatpush1.msra.mxu0 0.0
        %2101 = vmatprep.subr.mxu0 0.0
        %2102 = vmatpush1.msra.mxu0 0.0
        %2103 = vmatprep.subr.mxu0 0.0
        %2104 = vmatpush1.msra.mxu0 0.0
        %2105 = vmatprep.subr.mxu0 0.0
        %2106 = vmatpush1.msra.mxu0 0.0
        %2107 = vmatprep.subr.mxu0 0.0
        %2108 = vmatpush1.msra.mxu0 0.0
        %2109 = vmatprep.subr.mxu0 0.0
        %2110 = vmatpush1.msra.mxu0 0.0
        %2111 = vmatprep.subr.mxu0 0.0
        %2112 = vmatpush1.msra.mxu0 0.0
        %2113 = vmatprep.subr.mxu0 0.0
        %2114 = vmatpush1.msra.mxu0 0.0
        %2115 = vmatprep.subr.mxu0 0.0
        %2116 = vmatpush1.msra.mxu0 0.0
        %2117 = vmatprep.subr.mxu0 0.0
        %2118 = vmatpush1.msra.mxu0 0.0
        %2119 = vmatprep.subr.mxu0 0.0
        %2120 = vmatpush1.msra.mxu0 0.0
        %2121 = vmatprep.subr.mxu0 0.0
        %2122 = vmatpush1.msra.mxu0 0.0
        %2123 = vmatprep.subr.mxu0 0.0
        %2124 = vmatpush1.msra.mxu0 0.0
        %2125 = vmatprep.subr.mxu0 0.0
        %2126 = vmatpush1.msra.mxu0 0.0
        %2127 = vmatprep.subr.mxu0 0.0
        %2128 = vmatpush1.msra.mxu0 0.0
        %2129 = vmatprep.subr.mxu0 0.0
        %2130 = vmatpush1.msra.mxu0 0.0
        %2131 = vmatprep.subr.mxu0 0.0
        %2132 = vmatpush1.msra.mxu0 0.0
        %2133 = vmatprep.subr.mxu0 0.0
        %2134 = vmatpush1.msra.mxu0 0.0
        %2135 = vmatprep.subr.mxu0 0.0
        %2136 = vmatpush1.msra.mxu0 0.0
        %2137 = vmatprep.subr.mxu0 0.0
        %2138 = vmatpush1.msra.mxu0 0.0
        %2139 = vmatprep.subr.mxu0 0.0
        %2140 = vmatpush1.msra.mxu0 0.0
        %2141 = vmatprep.subr.mxu0 0.0
        %2142 = vmatpush1.msra.mxu0 0.0
        %2143 = vmatprep.subr.mxu0 0.0
        %2144 = vmatpush1.msra.mxu0 0.0
        %2145 = vmatprep.subr.mxu0 0.0
        %2146 = vmatpush1.msra.mxu0 0.0
        %2147 = vmatprep.subr.mxu0 0.0
        %2148 = vmatpush1.msra.mxu0 0.0
        %2149 = vmatprep.mubr.f32.mxu0 0.0
        %2150 = vmatmul.mubr.f32.gmra.mrb[0].mxu0 %v714
        %v2151 = vpop.f32.mrb[0].mxu0
        %v2152 = vadd.f32 0.0, %v2151
        %v2153 = vpop.f32.mrb[0].mxu0
        %2154 = vmatprep.mubr.f32.mxu0 0.0
        %2155 = vmatmul.mubr.f32.gmra.mrb[0].mxu0 %v716
        %v2156 = vpop.f32.mrb[0].mxu0
        %v2157 = vadd.f32 0.0, %v2156
        %v2158 = vpop.f32.mrb[0].mxu0
        %2159 = vmatprep.mubr.f32.mxu0 0.0
        %2160 = vmatmul.mubr.f32.gmra.mrb[0].mxu0 %v718
        %v2161 = vpop.f32.mrb[0].mxu0
        %v2162 = vadd.f32 0.0, %v2161
        %v2163 = vpop.f32.mrb[0].mxu0
        %2164 = vmatprep.mubr.f32.mxu0 0.0
        %2165 = vmatmul.mubr.f32.gmra.mrb[0].mxu0 %v720
        %v2166 = vpop.f32.mrb[0].mxu0
        %v2167 = vadd.f32 0.0, %v2166
        %v2168 = vpop.f32.mrb[0].mxu0
        %2169 = vmatprep.mubr.f32.mxu0 0.0
        %2170 = vmatmul.mubr.f32.gmra.mrb[0].mxu0 %v722
        %v2171 = vpop.f32.mrb[0].mxu0
        %v2172 = vadd.f32 0.0, %v2171
        %v2173 = vpop.f32.mrb[0].mxu0
        %2174 = vmatprep.mubr.f32.mxu0 0.0
        %2175 = vmatmul.mubr.f32.gmra.mrb[0].mxu0 %v724
        %v2176 = vpop.f32.mrb[0].mxu0
        %v2177 = vadd.f32 0.0, %v2176
        %v2178 = vpop.f32.mrb[0].mxu0
        %2179 = vmatprep.mubr.f32.mxu0 0.0
        %2180 = vmatmul.mubr.f32.gmra.mrb[0].mxu0 %v726
        %v2181 = vpop.f32.mrb[0].mxu0
        %v2182 = vadd.f32 0.0, %v2181
        %v2183 = vpop.f32.mrb[0].mxu0
        %2184 = vmatprep.mubr.f32.mxu0 0.0
        %2185 = vmatmul.mubr.f32.gmra.mrb[0].mxu0 %v728
        %v2186 = vpop.f32.mrb[0].mxu0
        %v2187 = vadd.f32 0.0, %v2186
        %v2188 = vpop.f32.mrb[0].mxu0
        %2189 = vmatprep.mubr.f32.mxu0 0.0
        %2190 = vmatmul.mubr.f32.gmra.mrb[0].mxu0 %v730
        %v2191 = vpop.f32.mrb[0].mxu0
        %v2192 = vadd.f32 0.0, %v2191
        %v2193 = vpop.f32.mrb[0].mxu0
        %2194 = vmatprep.mubr.f32.mxu0 0.0
        %2195 = vmatmul.mubr.f32.gmra.mrb[0].mxu0 %v732
        %v2196 = vpop.f32.mrb[0].mxu0
        %v2197 = vadd.f32 0.0, %v2196
        %v2198 = vpop.f32.mrb[0].mxu0
        %2199 = vmatprep.mubr.f32.mxu0 0.0
        %2200 = vmatmul.mubr.f32.gmra.mrb[0].mxu0 %v734
        %v2201 = vpop.f32.mrb[0].mxu0
        %v2202 = vadd.f32 0.0, %v2201
        %v2203 = vpop.f32.mrb[0].mxu0
        %2204 = vmatprep.mubr.f32.mxu0 0.0
        %2205 = vmatmul.mubr.f32.gmra.mrb[0].mxu0 %v736
        %v2206 = vpop.f32.mrb[0].mxu0
        %v2207 = vadd.f32 0.0, %v2206
        %v2208 = vpop.f32.mrb[0].mxu0
        %2209 = vmatprep.mubr.f32.mxu0 0.0
        %2210 = vmatmul.mubr.f32.gmra.mrb[0].mxu0 %v738
        %v2211 = vpop.f32.mrb[0].mxu0
        %v2212 = vadd.f32 0.0, %v2211
        %v2213 = vpop.f32.mrb[0].mxu0
        %2214 = vmatprep.mubr.f32.mxu0 0.0
        %2215 = vmatmul.mubr.f32.gmra.mrb[0].mxu0 %v740
        %v2216 = vpop.f32.mrb[0].mxu0
        %v2217 = vadd.f32 0.0, %v2216
        %v2218 = vpop.f32.mrb[0].mxu0
        %2219 = vmatprep.mubr.f32.mxu0 0.0
        %2220 = vmatmul.mubr.f32.gmra.mrb[0].mxu0 %v742
        %v2221 = vpop.f32.mrb[0].mxu0
        %v2222 = vadd.f32 0.0, %v2221
        %v2223 = vpop.f32.mrb[0].mxu0
        %2224 = vmatprep.mubr.f32.mxu0 0.0
        %2225 = vmatmul.mubr.f32.gmra.mrb[0].mxu0 %v744
        %v2226 = vpop.f32.mrb[0].mxu0
        %v2227 = vadd.f32 0.0, %v2226
        %v2228 = vpop.f32.mrb[0].mxu0
        %2229 = vmatprep.mubr.f32.mxu0 0.0
        %2230 = vmatmul.mubr.f32.gmra.mrb[0].mxu0 %v746
        %v2231 = vpop.f32.mrb[0].mxu0
        %v2232 = vadd.f32 0.0, %v2231
        %v2233 = vpop.f32.mrb[0].mxu0
        %2234 = vmatprep.mubr.f32.mxu0 0.0
        %2235 = vmatmul.mubr.f32.gmra.mrb[0].mxu0 %v748
        %v2236 = vpop.f32.mrb[0].mxu0
        %v2237 = vadd.f32 0.0, %v2236
        %v2238 = vpop.f32.mrb[0].mxu0
        %2239 = vmatprep.mubr.f32.mxu0 0.0
        %2240 = vmatmul.mubr.f32.gmra.mrb[0].mxu0 %v750
        %v2241 = vpop.f32.mrb[0].mxu0
        %v2242 = vadd.f32 0.0, %v2241
        %v2243 = vpop.f32.mrb[0].mxu0
        %2244 = vmatprep.mubr.f32.mxu0 0.0
        %2245 = vmatmul.mubr.f32.gmra.mrb[0].mxu0 %v752
        %v2246 = vpop.f32.mrb[0].mxu0
        %v2247 = vadd.f32 0.0, %v2246
        %v2248 = vpop.f32.mrb[0].mxu0
        %2249 = vmatprep.mubr.f32.mxu0 0.0
        %2250 = vmatmul.mubr.f32.gmra.mrb[0].mxu0 %v754
        %v2251 = vpop.f32.mrb[0].mxu0
        %v2252 = vadd.f32 0.0, %v2251
        %v2253 = vpop.f32.mrb[0].mxu0
        %2254 = vmatprep.mubr.f32.mxu0 0.0
        %2255 = vmatmul.mubr.f32.gmra.mrb[0].mxu0 %v756
        %v2256 = vpop.f32.mrb[0].mxu0
        %v2257 = vadd.f32 0.0, %v2256
        %v2258 = vpop.f32.mrb[0].mxu0
        %2259 = vmatprep.mubr.f32.mxu0 0.0
        %2260 = vmatmul.mubr.f32.gmra.mrb[0].mxu0 %v758
        %v2261 = vpop.f32.mrb[0].mxu0
        %v2262 = vadd.f32 0.0, %v2261
        %v2263 = vpop.f32.mrb[0].mxu0
        %2264 = vmatprep.mubr.f32.mxu0 0.0
        %2265 = vmatmul.mubr.f32.gmra.mrb[0].mxu0 %v760
        %v2266 = vpop.f32.mrb[0].mxu0
        %v2267 = vadd.f32 0.0, %v2266
        %v2268 = vpop.f32.mrb[0].mxu0
        %2269 = vmatprep.mubr.f32.mxu0 0.0
        %2270 = vmatmul.mubr.f32.gmra.mrb[0].mxu0 %v1338
        %v2271 = vpop.f32.mrb[0].mxu0
        %v2272 = vadd.f32 0.0, %v2271
        %v2273 = vpop.f32.mrb[0].mxu0
        %2274 = vmatprep.mubr.f32.mxu0 0.0
        %2275 = vmatmul.mubr.f32.gmra.mrb[0].mxu0 %v1341
        %v2276 = vpop.f32.mrb[0].mxu0
        %v2277 = vadd.f32 0.0, %v2276
        %v2278 = vpop.f32.mrb[0].mxu0
        %2279 = vmatprep.mubr.f32.mxu0 0.0
        %2280 = vmatmul.mubr.f32.gmra.mrb[0].mxu0 %v2077
        %v2281 = vpop.f32.mrb[0].mxu0
        %v2282 = vadd.f32 0.0, %v2281
        %v2283 = vpop.f32.mrb[0].mxu0
        %2284 = vmatprep.mubr.f32.mxu0 0.0
        %2285 = vmatmul.mubr.f32.gmra.mrb[0].mxu0 %v2080
        %v2286 = vpop.f32.mrb[0].mxu0
        %v2287 = vadd.f32 0.0, %v2286
        %v2288 = vpop.f32.mrb[0].mxu0
        %2289 = vdwg.mxu0
        %v2290 = vadd.f32 %v2046, %v2152
        %v2291 = vadd.f32 %v2047, %v2157
        %v2292 = vadd.f32 %v2048, %v2162
        %v2293 = vadd.f32 %v2049, %v2167
        %v2294 = vadd.f32 %v2050, %v2172
        %v2295 = vadd.f32 %v2051, %v2177
        %v2296 = vadd.f32 %v2052, %v2182
        %v2297 = vadd.f32 %v2053, %v2187
        %v2298 = vadd.f32 %v2054, %v2192
        %v2299 = vadd.f32 %v2055, %v2197
        %v2300 = vadd.f32 %v2056, %v2202
        %v2301 = vadd.f32 %v2057, %v2207
        %v2302 = vadd.f32 %v2058, %v2212
        %v2303 = vadd.f32 %v2059, %v2217
        %v2304 = vadd.f32 %v2060, %v2222
        %v2305 = vadd.f32 %v2061, %v2227
        %v2306 = vadd.f32 %v2062, %v2232
        %v2307 = vadd.f32 %v2063, %v2237
        %v2308 = vadd.f32 %v2064, %v2242
        %v2309 = vadd.f32 %v2065, %v2247
        %v2310 = vadd.f32 %v2066, %v2252
        %v2311 = vadd.f32 %v2067, %v2257
        %v2312 = vadd.f32 %v2068, %v2262
        %v2313 = vadd.f32 %v2069, %v2267
        %v2314 = vadd.f32 %v2070, %v2272
        %v2315 = vadd.f32 %v2071, %v2277
        %v2316 = vadd.f32 %v2072, %v2282
        %v2317 = vadd.f32 %v2073, %v2287
        %v2319 = vrot.slane %v321, 1
        %v2320 = vrot.slane %v322, 1
        %v2321 = vsel %vm367, %v2319, %v2320
        %v2322 = vrot.slane %v323, 1
        %v2323 = vsel %vm367, %v2320, %v2322
        %s2324 = scalar_lea.vmem %s2, 28
        %v2325 = vld [vmem:[%s2324] sm:$0xf]
        %v2326 = vsel %vm440, %v2321, 0
        %v2328 = vsel %vm440, %v2323, 0
        %v2331 = vsel %vm497, %v2325, 0
        %2333 = vmatprep.subr.mxu0 0.0
        %2334 = vmatpush1.msra.mxu0 %v2331
        %2335 = vmatprep.subr.mxu0 0.0
        %2336 = vmatpush1.msra.mxu0 0.0
        %2337 = vmatprep.subr.mxu0 0.0
        %2338 = vmatpush1.msra.mxu0 0.0
        %2339 = vmatprep.subr.mxu0 0.0
        %2340 = vmatpush1.msra.mxu0 0.0
        %2341 = vmatprep.subr.mxu0 0.0
        %2342 = vmatpush1.msra.mxu0 0.0
        %2343 = vmatprep.subr.mxu0 0.0
        %2344 = vmatpush1.msra.mxu0 0.0
        %2345 = vmatprep.subr.mxu0 0.0
        %2346 = vmatpush1.msra.mxu0 0.0
        %2347 = vmatprep.subr.mxu0 0.0
        %2348 = vmatpush1.msra.mxu0 0.0
        %2349 = vmatprep.subr.mxu0 0.0
        %2350 = vmatpush1.msra.mxu0 0.0
        %2351 = vmatprep.subr.mxu0 0.0
        %2352 = vmatpush1.msra.mxu0 0.0
        %2353 = vmatprep.subr.mxu0 0.0
        %2354 = vmatpush1.msra.mxu0 0.0
        %2355 = vmatprep.subr.mxu0 0.0
        %2356 = vmatpush1.msra.mxu0 0.0
        %2357 = vmatprep.subr.mxu0 0.0
        %2358 = vmatpush1.msra.mxu0 0.0
        %2359 = vmatprep.subr.mxu0 0.0
        %2360 = vmatpush1.msra.mxu0 0.0
        %2361 = vmatprep.subr.mxu0 0.0
        %2362 = vmatpush1.msra.mxu0 0.0
        %2363 = vmatprep.subr.mxu0 0.0
        %2364 = vmatpush1.msra.mxu0 0.0
        %2365 = vmatprep.subr.mxu0 0.0
        %2366 = vmatpush1.msra.mxu0 0.0
        %2367 = vmatprep.subr.mxu0 0.0
        %2368 = vmatpush1.msra.mxu0 0.0
        %2369 = vmatprep.subr.mxu0 0.0
        %2370 = vmatpush1.msra.mxu0 0.0
        %2371 = vmatprep.subr.mxu0 0.0
        %2372 = vmatpush1.msra.mxu0 0.0
        %2373 = vmatprep.subr.mxu0 0.0
        %2374 = vmatpush1.msra.mxu0 0.0
        %2375 = vmatprep.subr.mxu0 0.0
        %2376 = vmatpush1.msra.mxu0 0.0
        %2377 = vmatprep.subr.mxu0 0.0
        %2378 = vmatpush1.msra.mxu0 0.0
        %2379 = vmatprep.subr.mxu0 0.0
        %2380 = vmatpush1.msra.mxu0 0.0
        %2381 = vmatprep.subr.mxu0 0.0
        %2382 = vmatpush1.msra.mxu0 0.0
        %2383 = vmatprep.subr.mxu0 0.0
        %2384 = vmatpush1.msra.mxu0 0.0
        %2385 = vmatprep.subr.mxu0 0.0
        %2386 = vmatpush1.msra.mxu0 0.0
        %2387 = vmatprep.subr.mxu0 0.0
        %2388 = vmatpush1.msra.mxu0 0.0
        %2389 = vmatprep.subr.mxu0 0.0
        %2390 = vmatpush1.msra.mxu0 0.0
        %2391 = vmatprep.subr.mxu0 0.0
        %2392 = vmatpush1.msra.mxu0 0.0
        %2393 = vmatprep.subr.mxu0 0.0
        %2394 = vmatpush1.msra.mxu0 0.0
        %2395 = vmatprep.subr.mxu0 0.0
        %2396 = vmatpush1.msra.mxu0 0.0
        %2397 = vmatprep.mubr.f32.mxu0 0.0
        %2398 = vmatmul.mubr.f32.gmra.mrb[0].mxu0 %v449
        %v2399 = vpop.f32.mrb[0].mxu0
        %v2400 = vadd.f32 0.0, %v2399
        %v2401 = vpop.f32.mrb[0].mxu0
        %2402 = vmatprep.mubr.f32.mxu0 0.0
        %2403 = vmatmul.mubr.f32.gmra.mrb[0].mxu0 %v451
        %v2404 = vpop.f32.mrb[0].mxu0
        %v2405 = vadd.f32 0.0, %v2404
        %v2406 = vpop.f32.mrb[0].mxu0
        %2407 = vmatprep.mubr.f32.mxu0 0.0
        %2408 = vmatmul.mubr.f32.gmra.mrb[0].mxu0 %v453
        %v2409 = vpop.f32.mrb[0].mxu0
        %v2410 = vadd.f32 0.0, %v2409
        %v2411 = vpop.f32.mrb[0].mxu0
        %2412 = vmatprep.mubr.f32.mxu0 0.0
        %2413 = vmatmul.mubr.f32.gmra.mrb[0].mxu0 %v455
        %v2414 = vpop.f32.mrb[0].mxu0
        %v2415 = vadd.f32 0.0, %v2414
        %v2416 = vpop.f32.mrb[0].mxu0
        %2417 = vmatprep.mubr.f32.mxu0 0.0
        %2418 = vmatmul.mubr.f32.gmra.mrb[0].mxu0 %v457
        %v2419 = vpop.f32.mrb[0].mxu0
        %v2420 = vadd.f32 0.0, %v2419
        %v2421 = vpop.f32.mrb[0].mxu0
        %2422 = vmatprep.mubr.f32.mxu0 0.0
        %2423 = vmatmul.mubr.f32.gmra.mrb[0].mxu0 %v459
        %v2424 = vpop.f32.mrb[0].mxu0
        %v2425 = vadd.f32 0.0, %v2424
        %v2426 = vpop.f32.mrb[0].mxu0
        %2427 = vmatprep.mubr.f32.mxu0 0.0
        %2428 = vmatmul.mubr.f32.gmra.mrb[0].mxu0 %v461
        %v2429 = vpop.f32.mrb[0].mxu0
        %v2430 = vadd.f32 0.0, %v2429
        %v2431 = vpop.f32.mrb[0].mxu0
        %2432 = vmatprep.mubr.f32.mxu0 0.0
        %2433 = vmatmul.mubr.f32.gmra.mrb[0].mxu0 %v463
        %v2434 = vpop.f32.mrb[0].mxu0
        %v2435 = vadd.f32 0.0, %v2434
        %v2436 = vpop.f32.mrb[0].mxu0
        %2437 = vmatprep.mubr.f32.mxu0 0.0
        %2438 = vmatmul.mubr.f32.gmra.mrb[0].mxu0 %v465
        %v2439 = vpop.f32.mrb[0].mxu0
        %v2440 = vadd.f32 0.0, %v2439
        %v2441 = vpop.f32.mrb[0].mxu0
        %2442 = vmatprep.mubr.f32.mxu0 0.0
        %2443 = vmatmul.mubr.f32.gmra.mrb[0].mxu0 %v467
        %v2444 = vpop.f32.mrb[0].mxu0
        %v2445 = vadd.f32 0.0, %v2444
        %v2446 = vpop.f32.mrb[0].mxu0
        %2447 = vmatprep.mubr.f32.mxu0 0.0
        %2448 = vmatmul.mubr.f32.gmra.mrb[0].mxu0 %v469
        %v2449 = vpop.f32.mrb[0].mxu0
        %v2450 = vadd.f32 0.0, %v2449
        %v2451 = vpop.f32.mrb[0].mxu0
        %2452 = vmatprep.mubr.f32.mxu0 0.0
        %2453 = vmatmul.mubr.f32.gmra.mrb[0].mxu0 %v471
        %v2454 = vpop.f32.mrb[0].mxu0
        %v2455 = vadd.f32 0.0, %v2454
        %v2456 = vpop.f32.mrb[0].mxu0
        %2457 = vmatprep.mubr.f32.mxu0 0.0
        %2458 = vmatmul.mubr.f32.gmra.mrb[0].mxu0 %v473
        %v2459 = vpop.f32.mrb[0].mxu0
        %v2460 = vadd.f32 0.0, %v2459
        %v2461 = vpop.f32.mrb[0].mxu0
        %2462 = vmatprep.mubr.f32.mxu0 0.0
        %2463 = vmatmul.mubr.f32.gmra.mrb[0].mxu0 %v475
        %v2464 = vpop.f32.mrb[0].mxu0
        %v2465 = vadd.f32 0.0, %v2464
        %v2466 = vpop.f32.mrb[0].mxu0
        %2467 = vmatprep.mubr.f32.mxu0 0.0
        %2468 = vmatmul.mubr.f32.gmra.mrb[0].mxu0 %v477
        %v2469 = vpop.f32.mrb[0].mxu0
        %v2470 = vadd.f32 0.0, %v2469
        %v2471 = vpop.f32.mrb[0].mxu0
        %2472 = vmatprep.mubr.f32.mxu0 0.0
        %2473 = vmatmul.mubr.f32.gmra.mrb[0].mxu0 %v479
        %v2474 = vpop.f32.mrb[0].mxu0
        %v2475 = vadd.f32 0.0, %v2474
        %v2476 = vpop.f32.mrb[0].mxu0
        %2477 = vmatprep.mubr.f32.mxu0 0.0
        %2478 = vmatmul.mubr.f32.gmra.mrb[0].mxu0 %v481
        %v2479 = vpop.f32.mrb[0].mxu0
        %v2480 = vadd.f32 0.0, %v2479
        %v2481 = vpop.f32.mrb[0].mxu0
        %2482 = vmatprep.mubr.f32.mxu0 0.0
        %2483 = vmatmul.mubr.f32.gmra.mrb[0].mxu0 %v483
        %v2484 = vpop.f32.mrb[0].mxu0
        %v2485 = vadd.f32 0.0, %v2484
        %v2486 = vpop.f32.mrb[0].mxu0
        %2487 = vmatprep.mubr.f32.mxu0 0.0
        %2488 = vmatmul.mubr.f32.gmra.mrb[0].mxu0 %v485
        %v2489 = vpop.f32.mrb[0].mxu0
        %v2490 = vadd.f32 0.0, %v2489
        %v2491 = vpop.f32.mrb[0].mxu0
        %2492 = vmatprep.mubr.f32.mxu0 0.0
        %2493 = vmatmul.mubr.f32.gmra.mrb[0].mxu0 %v487
        %v2494 = vpop.f32.mrb[0].mxu0
        %v2495 = vadd.f32 0.0, %v2494
        %v2496 = vpop.f32.mrb[0].mxu0
        %2497 = vmatprep.mubr.f32.mxu0 0.0
        %2498 = vmatmul.mubr.f32.gmra.mrb[0].mxu0 %v489
        %v2499 = vpop.f32.mrb[0].mxu0
        %v2500 = vadd.f32 0.0, %v2499
        %v2501 = vpop.f32.mrb[0].mxu0
        %2502 = vmatprep.mubr.f32.mxu0 0.0
        %2503 = vmatmul.mubr.f32.gmra.mrb[0].mxu0 %v491
        %v2504 = vpop.f32.mrb[0].mxu0
        %v2505 = vadd.f32 0.0, %v2504
        %v2506 = vpop.f32.mrb[0].mxu0
        %2507 = vmatprep.mubr.f32.mxu0 0.0
        %2508 = vmatmul.mubr.f32.gmra.mrb[0].mxu0 %v493
        %v2509 = vpop.f32.mrb[0].mxu0
        %v2510 = vadd.f32 0.0, %v2509
        %v2511 = vpop.f32.mrb[0].mxu0
        %2512 = vmatprep.mubr.f32.mxu0 0.0
        %2513 = vmatmul.mubr.f32.gmra.mrb[0].mxu0 %v495
        %v2514 = vpop.f32.mrb[0].mxu0
        %v2515 = vadd.f32 0.0, %v2514
        %v2516 = vpop.f32.mrb[0].mxu0
        %2517 = vmatprep.mubr.f32.mxu0 0.0
        %2518 = vmatmul.mubr.f32.gmra.mrb[0].mxu0 %v1587
        %v2519 = vpop.f32.mrb[0].mxu0
        %v2520 = vadd.f32 0.0, %v2519
        %v2521 = vpop.f32.mrb[0].mxu0
        %2522 = vmatprep.mubr.f32.mxu0 0.0
        %2523 = vmatmul.mubr.f32.gmra.mrb[0].mxu0 %v1589
        %v2524 = vpop.f32.mrb[0].mxu0
        %v2525 = vadd.f32 0.0, %v2524
        %v2526 = vpop.f32.mrb[0].mxu0
        %2527 = vmatprep.mubr.f32.mxu0 0.0
        %2528 = vmatmul.mubr.f32.gmra.mrb[0].mxu0 %v2326
        %v2529 = vpop.f32.mrb[0].mxu0
        %v2530 = vadd.f32 0.0, %v2529
        %v2531 = vpop.f32.mrb[0].mxu0
        %2532 = vmatprep.mubr.f32.mxu0 0.0
        %2533 = vmatmul.mubr.f32.gmra.mrb[0].mxu0 %v2328
        %v2534 = vpop.f32.mrb[0].mxu0
        %v2535 = vadd.f32 0.0, %v2534
        %v2536 = vpop.f32.mrb[0].mxu0
        %2537 = vdwg.mxu0
        %v2538 = vadd.f32 %v2290, %v2400
        %v2539 = vadd.f32 %v2291, %v2405
        %v2540 = vadd.f32 %v2292, %v2410
        %v2541 = vadd.f32 %v2293, %v2415
        %v2542 = vadd.f32 %v2294, %v2420
        %v2543 = vadd.f32 %v2295, %v2425
        %v2544 = vadd.f32 %v2296, %v2430
        %v2545 = vadd.f32 %v2297, %v2435
        %v2546 = vadd.f32 %v2298, %v2440
        %v2547 = vadd.f32 %v2299, %v2445
        %v2548 = vadd.f32 %v2300, %v2450
        %v2549 = vadd.f32 %v2301, %v2455
        %v2550 = vadd.f32 %v2302, %v2460
        %v2551 = vadd.f32 %v2303, %v2465
        %v2552 = vadd.f32 %v2304, %v2470
        %v2553 = vadd.f32 %v2305, %v2475
        %v2554 = vadd.f32 %v2306, %v2480
        %v2555 = vadd.f32 %v2307, %v2485
        %v2556 = vadd.f32 %v2308, %v2490
        %v2557 = vadd.f32 %v2309, %v2495
        %v2558 = vadd.f32 %v2310, %v2500
        %v2559 = vadd.f32 %v2311, %v2505
        %v2560 = vadd.f32 %v2312, %v2510
        %v2561 = vadd.f32 %v2313, %v2515
        %v2562 = vadd.f32 %v2314, %v2520
        %v2563 = vadd.f32 %v2315, %v2525
        %v2564 = vadd.f32 %v2316, %v2530
        %v2565 = vadd.f32 %v2317, %v2535
        %v2566 = vrot.slane %v321, 2
        %v2567 = vrot.slane %v322, 2
        %v2568 = vsel %vm970, %v2566, %v2567
        %v2569 = vrot.slane %v323, 2
        %v2570 = vsel %vm970, %v2567, %v2569
        %s2571 = scalar_lea.vmem %s2, 32
        %v2572 = vld [vmem:[%s2571] sm:$0xf]
        %v2573 = vsel %vm440, %v2568, 0
        %v2575 = vsel %vm440, %v2570, 0
        %v2578 = vsel %vm497, %v2572, 0
        %2580 = vmatprep.subr.mxu0 0.0
        %2581 = vmatpush1.msra.mxu0 %v2578
        %2582 = vmatprep.subr.mxu0 0.0
        %2583 = vmatpush1.msra.mxu0 0.0
        %2584 = vmatprep.subr.mxu0 0.0
        %2585 = vmatpush1.msra.mxu0 0.0
        %2586 = vmatprep.subr.mxu0 0.0
        %2587 = vmatpush1.msra.mxu0 0.0
        %2588 = vmatprep.subr.mxu0 0.0
        %2589 = vmatpush1.msra.mxu0 0.0
        %2590 = vmatprep.subr.mxu0 0.0
        %2591 = vmatpush1.msra.mxu0 0.0
        %2592 = vmatprep.subr.mxu0 0.0
        %2593 = vmatpush1.msra.mxu0 0.0
        %2594 = vmatprep.subr.mxu0 0.0
        %2595 = vmatpush1.msra.mxu0 0.0
        %2596 = vmatprep.subr.mxu0 0.0
        %2597 = vmatpush1.msra.mxu0 0.0
        %2598 = vmatprep.subr.mxu0 0.0
        %2599 = vmatpush1.msra.mxu0 0.0
        %2600 = vmatprep.subr.mxu0 0.0
        %2601 = vmatpush1.msra.mxu0 0.0
        %2602 = vmatprep.subr.mxu0 0.0
        %2603 = vmatpush1.msra.mxu0 0.0
        %2604 = vmatprep.subr.mxu0 0.0
        %2605 = vmatpush1.msra.mxu0 0.0
        %2606 = vmatprep.subr.mxu0 0.0
        %2607 = vmatpush1.msra.mxu0 0.0
        %2608 = vmatprep.subr.mxu0 0.0
        %2609 = vmatpush1.msra.mxu0 0.0
        %2610 = vmatprep.subr.mxu0 0.0
        %2611 = vmatpush1.msra.mxu0 0.0
        %2612 = vmatprep.subr.mxu0 0.0
        %2613 = vmatpush1.msra.mxu0 0.0
        %2614 = vmatprep.subr.mxu0 0.0
        %2615 = vmatpush1.msra.mxu0 0.0
        %2616 = vmatprep.subr.mxu0 0.0
        %2617 = vmatpush1.msra.mxu0 0.0
        %2618 = vmatprep.subr.mxu0 0.0
        %2619 = vmatpush1.msra.mxu0 0.0
        %2620 = vmatprep.subr.mxu0 0.0
        %2621 = vmatpush1.msra.mxu0 0.0
        %2622 = vmatprep.subr.mxu0 0.0
        %2623 = vmatpush1.msra.mxu0 0.0
        %2624 = vmatprep.subr.mxu0 0.0
        %2625 = vmatpush1.msra.mxu0 0.0
        %2626 = vmatprep.subr.mxu0 0.0
        %2627 = vmatpush1.msra.mxu0 0.0
        %2628 = vmatprep.subr.mxu0 0.0
        %2629 = vmatpush1.msra.mxu0 0.0
        %2630 = vmatprep.subr.mxu0 0.0
        %2631 = vmatpush1.msra.mxu0 0.0
        %2632 = vmatprep.subr.mxu0 0.0
        %2633 = vmatpush1.msra.mxu0 0.0
        %2634 = vmatprep.subr.mxu0 0.0
        %2635 = vmatpush1.msra.mxu0 0.0
        %2636 = vmatprep.subr.mxu0 0.0
        %2637 = vmatpush1.msra.mxu0 0.0
        %2638 = vmatprep.subr.mxu0 0.0
        %2639 = vmatpush1.msra.mxu0 0.0
        %2640 = vmatprep.subr.mxu0 0.0
        %2641 = vmatpush1.msra.mxu0 0.0
        %2642 = vmatprep.subr.mxu0 0.0
        %2643 = vmatpush1.msra.mxu0 0.0
        %2644 = vmatprep.mubr.f32.mxu0 0.0
        %2645 = vmatmul.mubr.f32.gmra.mrb[0].mxu0 %v1051
        %v2646 = vpop.f32.mrb[0].mxu0
        %v2647 = vadd.f32 0.0, %v2646
        %v2648 = vpop.f32.mrb[0].mxu0
        %2649 = vmatprep.mubr.f32.mxu0 0.0
        %2650 = vmatmul.mubr.f32.gmra.mrb[0].mxu0 %v1053
        %v2651 = vpop.f32.mrb[0].mxu0
        %v2652 = vadd.f32 0.0, %v2651
        %v2653 = vpop.f32.mrb[0].mxu0
        %2654 = vmatprep.mubr.f32.mxu0 0.0
        %2655 = vmatmul.mubr.f32.gmra.mrb[0].mxu0 %v1055
        %v2656 = vpop.f32.mrb[0].mxu0
        %v2657 = vadd.f32 0.0, %v2656
        %v2658 = vpop.f32.mrb[0].mxu0
        %2659 = vmatprep.mubr.f32.mxu0 0.0
        %2660 = vmatmul.mubr.f32.gmra.mrb[0].mxu0 %v1057
        %v2661 = vpop.f32.mrb[0].mxu0
        %v2662 = vadd.f32 0.0, %v2661
        %v2663 = vpop.f32.mrb[0].mxu0
        %2664 = vmatprep.mubr.f32.mxu0 0.0
        %2665 = vmatmul.mubr.f32.gmra.mrb[0].mxu0 %v1059
        %v2666 = vpop.f32.mrb[0].mxu0
        %v2667 = vadd.f32 0.0, %v2666
        %v2668 = vpop.f32.mrb[0].mxu0
        %2669 = vmatprep.mubr.f32.mxu0 0.0
        %2670 = vmatmul.mubr.f32.gmra.mrb[0].mxu0 %v1061
        %v2671 = vpop.f32.mrb[0].mxu0
        %v2672 = vadd.f32 0.0, %v2671
        %v2673 = vpop.f32.mrb[0].mxu0
        %2674 = vmatprep.mubr.f32.mxu0 0.0
        %2675 = vmatmul.mubr.f32.gmra.mrb[0].mxu0 %v1063
        %v2676 = vpop.f32.mrb[0].mxu0
        %v2677 = vadd.f32 0.0, %v2676
        %v2678 = vpop.f32.mrb[0].mxu0
        %2679 = vmatprep.mubr.f32.mxu0 0.0
        %2680 = vmatmul.mubr.f32.gmra.mrb[0].mxu0 %v1065
        %v2681 = vpop.f32.mrb[0].mxu0
        %v2682 = vadd.f32 0.0, %v2681
        %v2683 = vpop.f32.mrb[0].mxu0
        %2684 = vmatprep.mubr.f32.mxu0 0.0
        %2685 = vmatmul.mubr.f32.gmra.mrb[0].mxu0 %v1067
        %v2686 = vpop.f32.mrb[0].mxu0
        %v2687 = vadd.f32 0.0, %v2686
        %v2688 = vpop.f32.mrb[0].mxu0
        %2689 = vmatprep.mubr.f32.mxu0 0.0
        %2690 = vmatmul.mubr.f32.gmra.mrb[0].mxu0 %v1069
        %v2691 = vpop.f32.mrb[0].mxu0
        %v2692 = vadd.f32 0.0, %v2691
        %v2693 = vpop.f32.mrb[0].mxu0
        %2694 = vmatprep.mubr.f32.mxu0 0.0
        %2695 = vmatmul.mubr.f32.gmra.mrb[0].mxu0 %v1071
        %v2696 = vpop.f32.mrb[0].mxu0
        %v2697 = vadd.f32 0.0, %v2696
        %v2698 = vpop.f32.mrb[0].mxu0
        %2699 = vmatprep.mubr.f32.mxu0 0.0
        %2700 = vmatmul.mubr.f32.gmra.mrb[0].mxu0 %v1073
        %v2701 = vpop.f32.mrb[0].mxu0
        %v2702 = vadd.f32 0.0, %v2701
        %v2703 = vpop.f32.mrb[0].mxu0
        %2704 = vmatprep.mubr.f32.mxu0 0.0
        %2705 = vmatmul.mubr.f32.gmra.mrb[0].mxu0 %v1075
        %v2706 = vpop.f32.mrb[0].mxu0
        %v2707 = vadd.f32 0.0, %v2706
        %v2708 = vpop.f32.mrb[0].mxu0
        %2709 = vmatprep.mubr.f32.mxu0 0.0
        %2710 = vmatmul.mubr.f32.gmra.mrb[0].mxu0 %v1077
        %v2711 = vpop.f32.mrb[0].mxu0
        %v2712 = vadd.f32 0.0, %v2711
        %v2713 = vpop.f32.mrb[0].mxu0
        %2714 = vmatprep.mubr.f32.mxu0 0.0
        %2715 = vmatmul.mubr.f32.gmra.mrb[0].mxu0 %v1079
        %v2716 = vpop.f32.mrb[0].mxu0
        %v2717 = vadd.f32 0.0, %v2716
        %v2718 = vpop.f32.mrb[0].mxu0
        %2719 = vmatprep.mubr.f32.mxu0 0.0
        %2720 = vmatmul.mubr.f32.gmra.mrb[0].mxu0 %v1081
        %v2721 = vpop.f32.mrb[0].mxu0
        %v2722 = vadd.f32 0.0, %v2721
        %v2723 = vpop.f32.mrb[0].mxu0
        %2724 = vmatprep.mubr.f32.mxu0 0.0
        %2725 = vmatmul.mubr.f32.gmra.mrb[0].mxu0 %v1083
        %v2726 = vpop.f32.mrb[0].mxu0
        %v2727 = vadd.f32 0.0, %v2726
        %v2728 = vpop.f32.mrb[0].mxu0
        %2729 = vmatprep.mubr.f32.mxu0 0.0
        %2730 = vmatmul.mubr.f32.gmra.mrb[0].mxu0 %v1085
        %v2731 = vpop.f32.mrb[0].mxu0
        %v2732 = vadd.f32 0.0, %v2731
        %v2733 = vpop.f32.mrb[0].mxu0
        %2734 = vmatprep.mubr.f32.mxu0 0.0
        %2735 = vmatmul.mubr.f32.gmra.mrb[0].mxu0 %v1087
        %v2736 = vpop.f32.mrb[0].mxu0
        %v2737 = vadd.f32 0.0, %v2736
        %v2738 = vpop.f32.mrb[0].mxu0
        %2739 = vmatprep.mubr.f32.mxu0 0.0
        %2740 = vmatmul.mubr.f32.gmra.mrb[0].mxu0 %v1089
        %v2741 = vpop.f32.mrb[0].mxu0
        %v2742 = vadd.f32 0.0, %v2741
        %v2743 = vpop.f32.mrb[0].mxu0
        %2744 = vmatprep.mubr.f32.mxu0 0.0
        %2745 = vmatmul.mubr.f32.gmra.mrb[0].mxu0 %v1091
        %v2746 = vpop.f32.mrb[0].mxu0
        %v2747 = vadd.f32 0.0, %v2746
        %v2748 = vpop.f32.mrb[0].mxu0
        %2749 = vmatprep.mubr.f32.mxu0 0.0
        %2750 = vmatmul.mubr.f32.gmra.mrb[0].mxu0 %v1093
        %v2751 = vpop.f32.mrb[0].mxu0
        %v2752 = vadd.f32 0.0, %v2751
        %v2753 = vpop.f32.mrb[0].mxu0
        %2754 = vmatprep.mubr.f32.mxu0 0.0
        %2755 = vmatmul.mubr.f32.gmra.mrb[0].mxu0 %v1095
        %v2756 = vpop.f32.mrb[0].mxu0
        %v2757 = vadd.f32 0.0, %v2756
        %v2758 = vpop.f32.mrb[0].mxu0
        %2759 = vmatprep.mubr.f32.mxu0 0.0
        %2760 = vmatmul.mubr.f32.gmra.mrb[0].mxu0 %v1097
        %v2761 = vpop.f32.mrb[0].mxu0
        %v2762 = vadd.f32 0.0, %v2761
        %v2763 = vpop.f32.mrb[0].mxu0
        %2764 = vmatprep.mubr.f32.mxu0 0.0
        %2765 = vmatmul.mubr.f32.gmra.mrb[0].mxu0 %v1834
        %v2766 = vpop.f32.mrb[0].mxu0
        %v2767 = vadd.f32 0.0, %v2766
        %v2768 = vpop.f32.mrb[0].mxu0
        %2769 = vmatprep.mubr.f32.mxu0 0.0
        %2770 = vmatmul.mubr.f32.gmra.mrb[0].mxu0 %v1836
        %v2771 = vpop.f32.mrb[0].mxu0
        %v2772 = vadd.f32 0.0, %v2771
        %v2773 = vpop.f32.mrb[0].mxu0
        %2774 = vmatprep.mubr.f32.mxu0 0.0
        %2775 = vmatmul.mubr.f32.gmra.mrb[0].mxu0 %v2573
        %v2776 = vpop.f32.mrb[0].mxu0
        %v2777 = vadd.f32 0.0, %v2776
        %v2778 = vpop.f32.mrb[0].mxu0
        %2779 = vmatprep.mubr.f32.mxu0 0.0
        %2780 = vmatmul.mubr.f32.gmra.mrb[0].mxu0 %v2575
        %v2781 = vpop.f32.mrb[0].mxu0
        %v2782 = vadd.f32 0.0, %v2781
        %v2783 = vpop.f32.mrb[0].mxu0
        %2784 = vdwg.mxu0
        %v2785 = vadd.f32 %v2538, %v2647
        %v2786 = vadd.f32 %v2539, %v2652
        %v2787 = vadd.f32 %v2540, %v2657
        %v2788 = vadd.f32 %v2541, %v2662
        %v2789 = vadd.f32 %v2542, %v2667
        %v2790 = vadd.f32 %v2543, %v2672
        %v2791 = vadd.f32 %v2544, %v2677
        %v2792 = vadd.f32 %v2545, %v2682
        %v2793 = vadd.f32 %v2546, %v2687
        %v2794 = vadd.f32 %v2547, %v2692
        %v2795 = vadd.f32 %v2548, %v2697
        %v2796 = vadd.f32 %v2549, %v2702
        %v2797 = vadd.f32 %v2550, %v2707
        %v2798 = vadd.f32 %v2551, %v2712
        %v2799 = vadd.f32 %v2552, %v2717
        %v2800 = vadd.f32 %v2553, %v2722
        %v2801 = vadd.f32 %v2554, %v2727
        %v2802 = vadd.f32 %v2555, %v2732
        %v2803 = vadd.f32 %v2556, %v2737
        %v2804 = vadd.f32 %v2557, %v2742
        %v2805 = vadd.f32 %v2558, %v2747
        %v2806 = vadd.f32 %v2559, %v2752
        %v2807 = vadd.f32 %v2560, %v2757
        %v2808 = vadd.f32 %v2561, %v2762
        %v2809 = vadd.f32 %v2562, %v2767
        %v2810 = vadd.f32 %v2563, %v2772
        %v2811 = vadd.f32 %v2564, %v2777
        %v2812 = vadd.f32 %v2565, %v2782
        %v2813 = vld [vmem:[%s3] sm:$0x1]
        %v2815 = vlaneseq
        %v2816 = vshrl.u32 %v2815, 7
        %v2817 = vsub.s32 0, %v2816
        %v2818 = vrot.slane %v2813, %v2817
        %v2820 = vadd.f32 %v2785, %v2818
        %v2821 = vadd.f32 %v2786, %v2818
        %v2822 = vadd.f32 %v2787, %v2818
        %v2823 = vadd.f32 %v2788, %v2818
        %v2824 = vadd.f32 %v2789, %v2818
        %v2825 = vadd.f32 %v2790, %v2818
        %v2826 = vadd.f32 %v2791, %v2818
        %v2827 = vadd.f32 %v2792, %v2818
        %v2828 = vadd.f32 %v2793, %v2818
        %v2829 = vadd.f32 %v2794, %v2818
        %v2830 = vadd.f32 %v2795, %v2818
        %v2831 = vadd.f32 %v2796, %v2818
        %v2832 = vadd.f32 %v2797, %v2818
        %v2833 = vadd.f32 %v2798, %v2818
        %v2834 = vadd.f32 %v2799, %v2818
        %v2835 = vadd.f32 %v2800, %v2818
        %v2836 = vadd.f32 %v2801, %v2818
        %v2837 = vadd.f32 %v2802, %v2818
        %v2838 = vadd.f32 %v2803, %v2818
        %v2839 = vadd.f32 %v2804, %v2818
        %v2840 = vadd.f32 %v2805, %v2818
        %v2841 = vadd.f32 %v2806, %v2818
        %v2842 = vadd.f32 %v2807, %v2818
        %v2843 = vadd.f32 %v2808, %v2818
        %v2844 = vadd.f32 %v2809, %v2818
        %v2845 = vadd.f32 %v2810, %v2818
        %v2846 = vadd.f32 %v2811, %v2818
        %v2847 = vadd.f32 %v2812, %v2818
        %2848 = vst [vmem:[%s250] sm:$0xff] %v2820
        %2849 = vst [vmem:[%s250 + $0x8] sm:$0xff] %v2821
        %2850 = vst [vmem:[%s250 + $0x10] sm:$0xff] %v2822
        %2851 = vst [vmem:[%s250 + $0x18] sm:$0xff] %v2823
        %2852 = vst [vmem:[%s250 + $0x20] sm:$0xff] %v2824
        %2853 = vst [vmem:[%s250 + $0x28] sm:$0xff] %v2825
        %2854 = vst [vmem:[%s250 + $0x30] sm:$0xff] %v2826
        %2855 = vst [vmem:[%s250 + $0x38] sm:$0xff] %v2827
        %2856 = vst [vmem:[%s250 + $0x40] sm:$0xff] %v2828
        %2857 = vst [vmem:[%s250 + $0x48] sm:$0xff] %v2829
        %2858 = vst [vmem:[%s250 + $0x50] sm:$0xff] %v2830
        %2859 = vst [vmem:[%s250 + $0x58] sm:$0xff] %v2831
        %2860 = vst [vmem:[%s250 + $0x60] sm:$0xff] %v2832
        %2861 = vst [vmem:[%s250 + $0x68] sm:$0xff] %v2833
        %2862 = vst [vmem:[%s250 + $0x70] sm:$0xff] %v2834
        %2863 = vst [vmem:[%s250 + $0x78] sm:$0xff] %v2835
        %2864 = vst [vmem:[%s250 + $0x80] sm:$0xff] %v2836
        %2865 = vst [vmem:[%s250 + $0x88] sm:$0xff] %v2837
        %2866 = vst [vmem:[%s250 + $0x90] sm:$0xff] %v2838
        %2867 = vst [vmem:[%s250 + $0x98] sm:$0xff] %v2839
        %2868 = vst [vmem:[%s250 + $0xa0] sm:$0xff] %v2840
        %2869 = vst [vmem:[%s250 + $0xa8] sm:$0xff] %v2841
        %2870 = vst [vmem:[%s250 + $0xb0] sm:$0xff] %v2842
        %2871 = vst [vmem:[%s250 + $0xb8] sm:$0xff] %v2843
        %2872 = vst [vmem:[%s250 + $0xc0] sm:$0xff] %v2844
        %2873 = vst [vmem:[%s250 + $0xc8] sm:$0xff] %v2845
        %2874 = vst [vmem:[%s250 + $0xd0] sm:$0xff] %v2846
        %2875 = vst [vmem:[%s250 + $0xd8] sm:$0xff] %v2847
        %s2876 = sand.u32 %s140, 1
        %s2877 = scalar_lea.sflag [#allocation3], %s2876
        %s2878 = sand.u32 %s140, 1
        %s2879 = smul.addr %s2878, 224
        %s2880 = scalar_lea.vmem [#allocation2], %s2879
        // Predicated region
        $region37: #{tpu_custom_call.1} parent=35 // pred_check
          %p2881 = pneg %p150
        $region38: #{tpu_custom_call.1} parent=35 // pred_check_branch
          %2883 = sbr.rel (%p2881) target = $region40
        $region39: #{tpu_custom_call.1} parent=35 // pred_region
          %s2884 = smul.u32 14, %s23
          %s2886 = ssub.s32 3584, 3584
          %2887 = vsyncadd %s2877, %s2886
          %s2888 = smul.addr %s2884, 2
          %s2889 = smul.addr %s22, 28
          %s2890 = sadd.s32 %s2888, %s2889
          %s2891 = smul.addr %s2890, 128
          %s2892 = scalar_lea.hbm %s4, %s2891
          %s2893 = sshll.u32 %s2880, 4
          %s2894 = int_to_ptr.vmem [resolvable:$true] %s2893
          %2899 = dma.vmem_to_hbm [thread:$0]  %s2894, 3584, %s2892, %s2877, 128, 128, 8
        $region40: #{tpu_custom_call.1} parent=35 // pred_fallthru
          _
      $region36: #{tpu_custom_call.1} parent=5 // pred_fallthru
        _
      %p2900 = scmp.le.s32.totalorder 2, %s13
      // Predicated region
      $region41: #{tpu_custom_call.1} parent=5 // pred_check
        %p2901 = pneg %p2900
      $region42: #{tpu_custom_call.1} parent=5 // pred_check_branch
        %2903 = sbr.rel (%p2901) target = $region44
      $region43: #{tpu_custom_call.1} parent=5 // pred_region
        %s2904 = ssub.s32 %s13, 2
        // Predicated region
        $region45: #{tpu_custom_call.1} parent=43 // pred_check
          %p2905 = pneg %p156
        $region46: #{tpu_custom_call.1} parent=43 // pred_check_branch
          %2907 = sbr.rel (%p2905) target = $region48
        $region47: #{tpu_custom_call.1} parent=43 // pred_region
          %s2908 = sand.u32 %s141, 1
          %s2909 = scalar_lea.sflag [#allocation3], %s2908
          %s2910 = sand.u32 %s141, 1
          %s2911 = smul.addr %s2910, 224
          %s2912 = scalar_lea.vmem [#allocation2], %s2911
          %2913 = dma.done %s2909, 3584
        $region48: #{tpu_custom_call.1} parent=43 // pred_fallthru
          _
      $region44: #{tpu_custom_call.1} parent=5 // pred_fallthru
        _
    $region6: #{tpu_custom_call.1} parent=1 // loop_footer
      %s17 = sadd.s32 1, %s13
    $region7: #{tpu_custom_call.1} parent=1 // loop_footer_branch
      %12 = sbr.rel target = $region3
    $region8: #{tpu_custom_call.1} parent=1 // loop_exit
      _
    %2914 = vsyncpa [#allocation3], 1
    %s2915 = scalar_lea.sflag [#allocation3], 1
    %2916 = vsyncpa %s2915, 1

</llo_original>
